<compile_context>
chip_gen: v7x
topology: tpu7x:2x2x1
jax: 0.10.0
libtpu: 0.0.40
codegen_flags: <defaults>
</compile_context>

<pallas_src>
import jax
import jax.numpy as jnp
from jax.experimental import pallas as pl
from jax.experimental.pallas import tpu as pltpu

EPS = 1e-5  # nn.LayerNorm default


def _layernorm_f32(x_f32, gamma_f32, beta_f32):
    mean = jnp.mean(x_f32, axis=-1, keepdims=True)
    centered = x_f32 - mean
    var = jnp.mean(centered * centered, axis=-1, keepdims=True)
    xn = centered * jax.lax.rsqrt(var + EPS)
    return xn * gamma_f32 + beta_f32


# ----------------------------------------------------------------------------
# Fused path: the whole (D, D) bf16 weight stays resident in VMEM.
# ----------------------------------------------------------------------------
def _fused_kernel(x_ref, gamma_ref, beta_ref, w_ref, b_ref, o_ref):
    # x_ref: (tm, D), gamma/beta/b: (1, D) f32, w_ref: (D, D) bf16
    x = x_ref[...].astype(jnp.float32)
    y = _layernorm_f32(x, gamma_ref[...], beta_ref[...])
    # bf16 operands on the MXU, f32 accumulation; bias folded into epilogue.
    out = jnp.dot(y.astype(w_ref.dtype), w_ref[...],
                  preferred_element_type=jnp.float32)
    o_ref[...] = (out + b_ref[...]).astype(o_ref.dtype)


# ----------------------------------------------------------------------------
# Tiled path (large D): grid = (rows, N tiles, K tiles), f32 accumulator,
# LayerNorm computed once per row tile and kept in VMEM across (N, K).
# ----------------------------------------------------------------------------
def _tiled_kernel(x_ref, gamma_ref, beta_ref, w_ref, b_ref, o_ref,
                  y_ref, acc_ref):
    # x_ref: (tm, D)          full rows (needed for the LN reduction)
    # w_ref: (tk, tn) bf16    weight tile
    # b_ref: (1, tn) f32      bias tile
    # y_ref: (nk, tm, tk)     normalized rows, split along K (scratch, bf16)
    # acc_ref: (tm, tn) f32   accumulator (scratch)
    j = pl.program_id(1)  # N tile
    k = pl.program_id(2)  # K tile (reduction axis, innermost, "arbitrary")
    nk, _, tk = y_ref.shape

    @pl.when((j == 0) & (k == 0))
    def _():
        x = x_ref[...].astype(jnp.float32)
        y = _layernorm_f32(x, gamma_ref[...], beta_ref[...]).astype(y_ref.dtype)
        for kk in range(nk):  # static unroll; runs once per row tile
            y_ref[kk] = y[:, kk * tk:(kk + 1) * tk]

    @pl.when(k == 0)
    def _():
        acc_ref[...] = jnp.zeros_like(acc_ref)

    acc_ref[...] += jnp.dot(y_ref[k], w_ref[...],
                            preferred_element_type=jnp.float32)

    @pl.when(k == pl.num_programs(2) - 1)
    def _():
        o_ref[...] = (acc_ref[...] + b_ref[...]).astype(o_ref.dtype)


# ----------------------------------------------------------------------------
# Wrapper
# ----------------------------------------------------------------------------
def _pick_tm(n_rows, requested=None):
    if requested is not None:
        return requested
    try:
        kind = jax.devices()[0].device_kind.lower()
    except Exception:
        kind = ""
    # v5e: 4x128^2 MXU + 16 MiB default scoped VMEM -> cap at 256.
    # v6e/v7x: 2x256^2 MXU -> prefer 512.
    cap = 256 if "v5" in kind else 512
    tm = cap
    # Keep >= 2 grid steps (both v7x TensorCores get work) and bound padding.
    while tm > 16 and n_rows < 2 * tm:
        tm //= 2
    return tm


def normal_forward(x, gamma, beta, w, b, *, tm=None, tn=None, tk=None,
                   mxu_dtype=jnp.bfloat16, force_tiled=False):
    """Pallas equivalent of Normal(dim, block): block(LayerNorm(x)).

    x: (..., D). LayerNorm statistics in f32; the Linear matmul runs on the
    MXU with `mxu_dtype` (bf16) operands and f32 accumulation.
    """
    orig_shape = x.shape
    D = orig_shape[-1]
    # TODO(synk): D not a multiple of 128 would need lane masking for the
    # LayerNorm reduction; not implemented here.
    assert D % 128 == 0, "feature dim must be a multiple of 128 (lane width)"

    x2 = x.reshape(-1, D)
    R = x2.shape[0]

    tm = _pick_tm(R, tm)
    R_pad = pl.cdiv(R, tm) * tm
    if R_pad != R:
        x2 = jnp.pad(x2, ((0, R_pad - R), (0, 0)))  # zero rows are harmless

    gamma2 = gamma.reshape(1, D).astype(jnp.float32)
    beta2 = beta.reshape(1, D).astype(jnp.float32)
    b2 = b.reshape(1, D).astype(jnp.float32)
    wq = w.astype(mxu_dtype)  # MXU-native operand; f32 accumulation in-kernel

    itemsize = x2.dtype.itemsize
    # Resident (D, D) weight only while it is comfortably small; otherwise
    # tile it so the design also fits v7x's 64 MiB VMEM.
    use_tiled = force_tiled or (D * D * wq.dtype.itemsize > 8 * 2**20)

    if not use_tiled:
        est = (2 * tm * D * itemsize            # x double-buffer
               + 2 * tm * D * itemsize          # out double-buffer
               + 2 * D * D * wq.dtype.itemsize  # resident weight (worst case)
               + 8 * D * 4)                     # gamma / beta / bias
        vmem_limit = int(min(64 * 2**20, max(32 * 2**20, 2 * est)))
        out2 = pl.pallas_call(
            _fused_kernel,
            out_shape=jax.ShapeDtypeStruct((R_pad, D), x.dtype),
            grid_spec=pltpu.PrefetchScalarGridSpec(
                num_scalar_prefetch=0,
                grid=(R_pad // tm,),
                in_specs=[
                    pl.BlockSpec((tm, D), lambda i: (i, 0)),   # x rows
                    pl.BlockSpec((1, D), lambda i: (0, 0)),    # gamma (resident)
                    pl.BlockSpec((1, D), lambda i: (0, 0)),    # beta  (resident)
                    pl.BlockSpec((D, D), lambda i: (0, 0)),    # W     (resident, bf16)
                    pl.BlockSpec((1, D), lambda i: (0, 0)),    # bias  (resident)
                ],
                out_specs=pl.BlockSpec((tm, D), lambda i: (i, 0)),
            ),
            compiler_params=pltpu.CompilerParams(
                dimension_semantics=("parallel",),
                vmem_limit_bytes=vmem_limit),
        )(x2, gamma2, beta2, wq, b2)
    else:
        tn = tn or (256 if D % 256 == 0 else 128)
        tk = tk or (256 if D % 256 == 0 else 128)
        assert D % tn == 0 and D % tk == 0
        grid = (R_pad // tm, D // tn, D // tk)
        est = (2 * tm * D * itemsize                 # x rows (revisited)
               + 2 * tm * tn * itemsize              # out double-buffer
               + 2 * tk * tn * wq.dtype.itemsize     # weight tiles
               + tm * D * wq.dtype.itemsize          # normalized-row scratch
               + tm * tn * 4                         # f32 accumulator
               + 8 * D * 4)
        vmem_limit = int(min(64 * 2**20, max(32 * 2**20, 2 * est)))
        out2 = pl.pallas_call(
            _tiled_kernel,
            out_shape=jax.ShapeDtypeStruct((R_pad, D), x.dtype),
            grid_spec=pltpu.PrefetchScalarGridSpec(
                num_scalar_prefetch=0,
                grid=grid,
                in_specs=[
                    pl.BlockSpec((tm, D), lambda i, j, k: (i, 0)),   # full rows for LN
                    pl.BlockSpec((1, D), lambda i, j, k: (0, 0)),    # gamma
                    pl.BlockSpec((1, D), lambda i, j, k: (0, 0)),    # beta
                    pl.BlockSpec((tk, tn), lambda i, j, k: (k, j)),  # W tile
                    pl.BlockSpec((1, tn), lambda i, j, k: (0, j)),   # bias tile
                ],
                out_specs=pl.BlockSpec((tm, tn), lambda i, j, k: (i, j)),
                scratch_shapes=[
                    pltpu.VMEM((D // tk, tm, tk), mxu_dtype),  # normalized rows
                    pltpu.VMEM((tm, tn), jnp.float32),         # accumulator
                ],
            ),
            compiler_params=pltpu.CompilerParams(
                # N and K stay "arbitrary": the normalized-row scratch is
                # written at (j==0, k==0) and reused across the (N, K) loop.
                dimension_semantics=("parallel", "arbitrary", "arbitrary"),
                vmem_limit_bytes=vmem_limit),
        )(x2, gamma2, beta2, wq, b2)

    return out2[:R].reshape(orig_shape)


def _reference(x, gamma, beta, w, b, mxu_dtype=jnp.bfloat16):
    """block(LayerNorm(x)) with the same bf16-operand / f32-accumulate matmul."""
    xf = x.astype(jnp.float32)
    mean = jnp.mean(xf, axis=-1, keepdims=True)
    var = jnp.mean((xf - mean) ** 2, axis=-1, keepdims=True)
    xn = (xf - mean) * jax.lax.rsqrt(var + EPS)
    y = xn * gamma + beta
    out = jnp.dot(y.astype(mxu_dtype), w.astype(mxu_dtype),
                  preferred_element_type=jnp.float32) + b
    return out.astype(x.dtype)


if __name__ == "__main__":
    # Shapes consistent with the module: (batch, seq, dim).
    B, S, D = 2, 512, 256
    key = jax.random.PRNGKey(0)
    kx, kw, kb = jax.random.split(key, 3)

    x = jax.random.normal(kx, (B, S, D), dtype=jnp.float32)

    # LayerNorm params (PyTorch init: weight=1, bias=0).
    gamma = jnp.ones((D,), jnp.float32)
    beta = jnp.zeros((D,), jnp.float32)

    # TODO(synk): `block` is an arbitrary user-supplied nn.Module; a Linear
    # (dim -> dim) projection is used here as a concrete stand-in.
    w = jax.random.normal(kw, (D, D), dtype=jnp.float32) * (1.0 / jnp.sqrt(D))
    b = jax.random.normal(kb, (D,), dtype=jnp.float32) * 0.01

    ref = _reference(x, gamma, beta, w, b)

    # Fused path (resident bf16 weight, large row tile).
    out = jax.block_until_ready(normal_forward(x, gamma, beta, w, b))
    assert out.shape == (B, S, D)
    assert jnp.allclose(out, ref, atol=1e-3, rtol=1e-3), "fused path mismatch"

    # Tiled path (N/K-tiled weight + f32 accumulator) — the large-D codepath,
    # exercised here at small D for correctness.
    out_t = jax.block_until_ready(
        normal_forward(x, gamma, beta, w, b, force_tiled=True, tn=128, tk=128))
    assert jnp.allclose(out_t, ref, atol=1e-3, rtol=1e-3), "tiled path mismatch"

    # Ragged row count (exercises the padding path instead of hard asserts).
    x_odd = x[:, :187, :]
    out_odd = jax.block_until_ready(normal_forward(x_odd, gamma, beta, w, b))
    ref_odd = _reference(x_odd, gamma, beta, w, b)
    assert jnp.allclose(out_odd, ref_odd, atol=1e-3, rtol=1e-3), "ragged mismatch"

    print("KERNEL_OK")
</pallas_src>

<mosaic_0001>
module attributes {stable_mosaic.version = 11 : i64} {
  func.func @_fused_kernel(%arg0: i32, %arg1: memref<512x256xf32, #tpu.memory_space<vmem>>, %arg2: memref<1x256xf32, #tpu.memory_space<vmem>>, %arg3: memref<1x256xf32, #tpu.memory_space<vmem>>, %arg4: memref<256x256xbf16, #tpu.memory_space<vmem>>, %arg5: memref<1x256xf32, #tpu.memory_space<vmem>>, %arg6: memref<512x256xf32, #tpu.memory_space<vmem>>) attributes {dimension_semantics = [#tpu.dimension_semantics<parallel>], iteration_bounds = array<i64: 2>, scalar_prefetch = 0 : i64, scratch_operands = 0 : i64, tpu.core_type = #tpu.core_type<tc>, window_params = [{transform_indices = @transform_0, window_bounds = array<i64: 512, 256>}, {pipeline_mode = #tpu.pipeline_mode<synchronous>, transform_indices = @transform_1, window_bounds = array<i64: 1, 256>}, {pipeline_mode = #tpu.pipeline_mode<synchronous>, transform_indices = @transform_2, window_bounds = array<i64: 1, 256>}, {pipeline_mode = #tpu.pipeline_mode<synchronous>, transform_indices = @transform_3, window_bounds = array<i64: 256, 256>}, {pipeline_mode = #tpu.pipeline_mode<synchronous>, transform_indices = @transform_4, window_bounds = array<i64: 1, 256>}, {transform_indices = @transform_5, window_bounds = array<i64: 512, 256>}]} {
    %c0 = arith.constant 0 : index
    %c0_0 = arith.constant 0 : index
    %0 = vector.load %arg1[%c0, %c0_0] : memref<512x256xf32, #tpu.memory_space<vmem>>, vector<512x256xf32>
    %c0_1 = arith.constant 0 : index
    %c0_2 = arith.constant 0 : index
    %1 = vector.load %arg2[%c0_1, %c0_2] : memref<1x256xf32, #tpu.memory_space<vmem>>, vector<1x256xf32>
    %c0_3 = arith.constant 0 : index
    %c0_4 = arith.constant 0 : index
    %2 = vector.load %arg3[%c0_3, %c0_4] : memref<1x256xf32, #tpu.memory_space<vmem>>, vector<1x256xf32>
    %cst = arith.constant dense<0.000000e+00> : vector<512xf32>
    %3 = vector.multi_reduction <add>, %0, %cst [1] : vector<512x256xf32> to vector<512xf32>
    %4 = vector.shape_cast %3 : vector<512xf32> to vector<512x1xf32>
    %cst_5 = arith.constant 2.560000e+02 : f32
    %5 = vector.broadcast %cst_5 : f32 to vector<512x1xf32>
    %6 = arith.divf %4, %5 : vector<512x1xf32>
    %7 = vector.broadcast %6 : vector<512x1xf32> to vector<512x256xf32>
    %8 = arith.subf %0, %7 : vector<512x256xf32>
    %9 = arith.mulf %8, %8 : vector<512x256xf32>
    %cst_6 = arith.constant dense<0.000000e+00> : vector<512xf32>
    %10 = vector.multi_reduction <add>, %9, %cst_6 [1] : vector<512x256xf32> to vector<512xf32>
    %11 = vector.shape_cast %10 : vector<512xf32> to vector<512x1xf32>
    %cst_7 = arith.constant 2.560000e+02 : f32
    %12 = vector.broadcast %cst_7 : f32 to vector<512x1xf32>
    %13 = arith.divf %11, %12 : vector<512x1xf32>
    %cst_8 = arith.constant 9.99999974E-6 : f32
    %14 = vector.broadcast %cst_8 : f32 to vector<512x1xf32>
    %15 = arith.addf %13, %14 : vector<512x1xf32>
    %16 = math.rsqrt %15 : vector<512x1xf32>
    %17 = vector.broadcast %16 : vector<512x1xf32> to vector<512x256xf32>
    %18 = arith.mulf %8, %17 : vector<512x256xf32>
    %19 = vector.broadcast %1 : vector<1x256xf32> to vector<512x256xf32>
    %20 = arith.mulf %18, %19 : vector<512x256xf32>
    %21 = vector.broadcast %2 : vector<1x256xf32> to vector<512x256xf32>
    %22 = arith.addf %20, %21 : vector<512x256xf32>
    %23 = arith.truncf %22 : vector<512x256xf32> to vector<512x256xbf16>
    %c0_9 = arith.constant 0 : index
    %c0_10 = arith.constant 0 : index
    %24 = vector.load %arg4[%c0_9, %c0_10] : memref<256x256xbf16, #tpu.memory_space<vmem>>, vector<256x256xbf16>
    %cst_11 = arith.constant dense<0.000000e+00> : vector<512x256xf32>
    %25 = tpu.matmul %23, %24, %cst_11 {dimension_numbers = #tpu.dot_dimension_numbers<[1], [0], [0], [1], [0, 0, 1, 1], [], []>} : vector<512x256xbf16>, vector<256x256xbf16>, vector<512x256xf32> -> vector<512x256xf32>
    %c0_12 = arith.constant 0 : index
    %c0_13 = arith.constant 0 : index
    %26 = vector.load %arg5[%c0_12, %c0_13] : memref<1x256xf32, #tpu.memory_space<vmem>>, vector<1x256xf32>
    %27 = vector.broadcast %26 : vector<1x256xf32> to vector<512x256xf32>
    %28 = arith.addf %25, %27 : vector<512x256xf32>
    %c0_14 = arith.constant 0 : index
    %c0_15 = arith.constant 0 : index
    %29 = vector.load %arg6[%c0_14, %c0_15] : memref<512x256xf32, #tpu.memory_space<vmem>>, vector<512x256xf32>
    tpu.vector_store %arg6[%c0_14, %c0_15], %28 {strides = array<i32>} : memref<512x256xf32, #tpu.memory_space<vmem>>, vector<512x256xf32>,
    return
  }
  func.func @transform_0(%arg0: i32) -> (i32, i32) {
    %c0_i32 = arith.constant 0 : i32
    %c0_i32_0 = arith.constant 0 : i32
    return %arg0, %c0_i32 : i32, i32
  }
  func.func @transform_1(%arg0: i32) -> (i32, i32) {
    %c0_i32 = arith.constant 0 : i32
    %c0_i32_0 = arith.constant 0 : i32
    %c0_i32_1 = arith.constant 0 : i32
    return %c0_i32, %c0_i32_0 : i32, i32
  }
  func.func @transform_2(%arg0: i32) -> (i32, i32) {
    %c0_i32 = arith.constant 0 : i32
    %c0_i32_0 = arith.constant 0 : i32
    %c0_i32_1 = arith.constant 0 : i32
    return %c0_i32, %c0_i32_0 : i32, i32
  }
  func.func @transform_3(%arg0: i32) -> (i32, i32) {
    %c0_i32 = arith.constant 0 : i32
    %c0_i32_0 = arith.constant 0 : i32
    %c0_i32_1 = arith.constant 0 : i32
    return %c0_i32, %c0_i32_0 : i32, i32
  }
  func.func @transform_4(%arg0: i32) -> (i32, i32) {
    %c0_i32 = arith.constant 0 : i32
    %c0_i32_0 = arith.constant 0 : i32
    %c0_i32_1 = arith.constant 0 : i32
    return %c0_i32, %c0_i32_0 : i32, i32
  }
  func.func @transform_5(%arg0: i32) -> (i32, i32) {
    %c0_i32 = arith.constant 0 : i32
    %c0_i32_0 = arith.constant 0 : i32
    return %arg0, %c0_i32 : i32, i32
  }
}

</mosaic_0001>

<llo_original>
// kernel: tpu_custom_call.1
$region0: #{tpu_custom_call.1}
  #allocation0 [shape = 'u32[]', space=smem, size = 0x4, offset = 0x4, fixed_abs, tag = 'smem constant byte address 0x4 - core index']
  #allocation1 [shape = 'u32[144,128]{1,0:T(1,128)}', space=vmem, size = 0x12000, scoped, tag = 'internal scratch']
  %s0 = inlined_call_operand.hbm [shape: f32[1024,256], index: 0, kind: input, shape index: {}]
  %s1 = inlined_call_operand.vmem [shape: f32[1,256], index: 1, kind: input, shape index: {}]
  %s2 = inlined_call_operand.vmem [shape: f32[1,256], index: 2, kind: input, shape index: {}]
  %s3 = inlined_call_operand.hbm [shape: bf16[256,256], index: 3, kind: input, shape index: {}]
  %s4 = inlined_call_operand.vmem [shape: f32[1,256], index: 4, kind: input, shape index: {}]
  %s5 = inlined_call_operand.hbm [shape: f32[1024,256], index: 5, kind: output, shape index: {}]
  %s6 = sld [smem:[#allocation0]]
  $region61: #{tpu_custom_call.1} parent=0
    _
  %s8 = ssub.s32 1, %s6
  %s9 = scalar_select 0, %s8, %s6
  $region1: #{tpu_custom_call.1} parent=0
    #allocation2 [shape = 'u8[1048576]{0}', space=vmem, size = 0x100000, scoped, tag = 'input window, operand 0']
    #allocation3 [shape = 's32[2]{0}', space=sflag, size = 0x8, scoped, tag = 'scoped memory for tpu_custom_call.1']
    #allocation4 [shape = 's32[2]{0}', space=sflag, size = 0x8, scoped, tag = 'scoped memory for tpu_custom_call.1']
    #allocation5 [shape = 'u8[131072]{0}', space=vmem, size = 0x20000, scoped, tag = 'input window, operand 3, single buffered']
    #allocation6 [shape = 's32[1]{0}', space=sflag, size = 0x4, scoped, tag = 'scoped memory for tpu_custom_call.1']
    #allocation7 [shape = 'u8[1048576]{0}', space=vmem, size = 0x100000, scoped, tag = 'output window, operand 0']
    %10 = vsyncpa [#allocation3], 0
    %s11 = scalar_lea.sflag [#allocation3], 1
    %12 = vsyncpa %s11, 0
    %13 = vsyncpa [#allocation6], 0
    %14 = vsyncpa [#allocation4], 0
    %s15 = scalar_lea.sflag [#allocation4], 1
    %16 = vsyncpa %s15, 0
    loop: start=0, step=1, limit=4
    $region2: #{tpu_custom_call.1} parent=1 // loop_pre_header
      _
    $region3: #{tpu_custom_call.1} parent=1 // loop_header
      %s18 = sphi 0, %s22
      %p19 = scmp.ge.s32.totalorder %s18, 4
      %s28 = sphi 0, %s30
      %s31 = sphi 0, %s28
      %s32 = sphi 0, %s31
      %s48 = sphi 0, %s32
      %s52 = sphi 0, %s52
      %s54 = sphi 0, %s52
      %s55 = sphi 0, %s54
      %s69 = sphi 0, %s55
      %s73 = sphi 0, %s73
      %s75 = sphi 0, %s73
      %s76 = sphi 0, %s75
      %s90 = sphi 0, %s76
      %s94 = sphi 0, %s94
      %s96 = sphi 0, %s94
      %s97 = sphi 0, %s96
      %s111 = sphi 0, %s97
      %s115 = sphi 0, %s115
      %s117 = sphi 0, %s115
      %s118 = sphi 0, %s117
      %s132 = sphi 0, %s118
      %s138 = sphi 0, %s140
      %s141 = sphi 0, %s138
      %s142 = sphi 0, %s141
      %s158 = sphi 0, %s142
    $region4: #{tpu_custom_call.1} parent=1 // loop_header_branch
      %21 = sbr.rel (%p19) target = $region8
    $region5: #{tpu_custom_call.1} parent=1 // loop_body
      %s23 = ssub.s32 %s18, 1
      %s24 = ssub.s32 %s18, 2
      %s25 = sadd.s32 %s18, 1
      %s26 = ssub.s32 %s18, %s25
      %p27 = scmp.eq.s32.totalorder %s26, 0
      %s29 = sadd.s32 %s28, 1
      %s30 = scalar_select %p27, %s28, %s29
      %p33 = pneg %p27
      %p34 = scmp.eq.s32.totalorder %s18, 1
      %p35 = por %p33, %p34
      %p36 = scmp.ne.s32.totalorder %s28, %s31
      %p37 = scmp.eq.s32.totalorder %s18, 0
      %p38 = por %p36, %p37
      %p39 = scmp.ne.s32.totalorder %s28, %s31
      %p40 = scmp.eq.s32.totalorder %s23, 1
      %p41 = por %p39, %p40
      %p42 = scmp.ne.s32.totalorder %s31, %s32
      %p43 = scmp.eq.s32.totalorder %s23, 0
      %p44 = por %p42, %p43
      %p45 = scmp.ne.s32.totalorder %s31, %s32
      %p46 = scmp.eq.s32.totalorder %s24, 1
      %p47 = por %p45, %p46
      %p49 = scmp.ne.s32.totalorder %s32, %s48
      %p50 = scmp.eq.s32.totalorder %s24, 0
      %p51 = por %p49, %p50
      %s53 = sadd.s32 %s52, 1
      %p56 = scmp.eq.s32.totalorder %s18, 1
      %p57 = scmp.ne.s32.totalorder %s52, %s54
      %p58 = scmp.eq.s32.totalorder %s18, 0
      %p59 = por %p57, %p58
      %p60 = scmp.ne.s32.totalorder %s52, %s54
      %p61 = scmp.eq.s32.totalorder %s23, 1
      %p62 = por %p60, %p61
      %p63 = scmp.ne.s32.totalorder %s54, %s55
      %p64 = scmp.eq.s32.totalorder %s23, 0
      %p65 = por %p63, %p64
      %p66 = scmp.ne.s32.totalorder %s54, %s55
      %p67 = scmp.eq.s32.totalorder %s24, 1
      %p68 = por %p66, %p67
      %p70 = scmp.ne.s32.totalorder %s55, %s69
      %p71 = scmp.eq.s32.totalorder %s24, 0
      %p72 = por %p70, %p71
      %s74 = sadd.s32 %s73, 1
      %p77 = scmp.eq.s32.totalorder %s18, 1
      %p78 = scmp.ne.s32.totalorder %s73, %s75
      %p79 = scmp.eq.s32.totalorder %s18, 0
      %p80 = por %p78, %p79
      %p81 = scmp.ne.s32.totalorder %s73, %s75
      %p82 = scmp.eq.s32.totalorder %s23, 1
      %p83 = por %p81, %p82
      %p84 = scmp.ne.s32.totalorder %s75, %s76
      %p85 = scmp.eq.s32.totalorder %s23, 0
      %p86 = por %p84, %p85
      %p87 = scmp.ne.s32.totalorder %s75, %s76
      %p88 = scmp.eq.s32.totalorder %s24, 1
      %p89 = por %p87, %p88
      %p91 = scmp.ne.s32.totalorder %s76, %s90
      %p92 = scmp.eq.s32.totalorder %s24, 0
      %p93 = por %p91, %p92
      %s95 = sadd.s32 %s94, 1
      %p98 = scmp.eq.s32.totalorder %s18, 1
      %p99 = scmp.ne.s32.totalorder %s94, %s96
      %p100 = scmp.eq.s32.totalorder %s18, 0
      %p101 = por %p99, %p100
      %p102 = scmp.ne.s32.totalorder %s94, %s96
      %p103 = scmp.eq.s32.totalorder %s23, 1
      %p104 = por %p102, %p103
      %p105 = scmp.ne.s32.totalorder %s96, %s97
      %p106 = scmp.eq.s32.totalorder %s23, 0
      %p107 = por %p105, %p106
      %p108 = scmp.ne.s32.totalorder %s96, %s97
      %p109 = scmp.eq.s32.totalorder %s24, 1
      %p110 = por %p108, %p109
      %p112 = scmp.ne.s32.totalorder %s97, %s111
      %p113 = scmp.eq.s32.totalorder %s24, 0
      %p114 = por %p112, %p113
      %s116 = sadd.s32 %s115, 1
      %p119 = scmp.eq.s32.totalorder %s18, 1
      %p120 = scmp.ne.s32.totalorder %s115, %s117
      %p121 = scmp.eq.s32.totalorder %s18, 0
      %p122 = por %p120, %p121
      %p123 = scmp.ne.s32.totalorder %s115, %s117
      %p124 = scmp.eq.s32.totalorder %s23, 1
      %p125 = por %p123, %p124
      %p126 = scmp.ne.s32.totalorder %s117, %s118
      %p127 = scmp.eq.s32.totalorder %s23, 0
      %p128 = por %p126, %p127
      %p129 = scmp.ne.s32.totalorder %s117, %s118
      %p130 = scmp.eq.s32.totalorder %s24, 1
      %p131 = por %p129, %p130
      %p133 = scmp.ne.s32.totalorder %s118, %s132
      %p134 = scmp.eq.s32.totalorder %s24, 0
      %p135 = por %p133, %p134
      %s136 = ssub.s32 %s18, %s25
      %p137 = scmp.eq.s32.totalorder %s136, 0
      %s139 = sadd.s32 %s138, 1
      %s140 = scalar_select %p137, %s138, %s139
      %p143 = pneg %p137
      %p144 = scmp.eq.s32.totalorder %s18, 1
      %p145 = por %p143, %p144
      %p146 = scmp.ne.s32.totalorder %s138, %s141
      %p147 = scmp.eq.s32.totalorder %s18, 0
      %p148 = por %p146, %p147
      %p149 = scmp.ne.s32.totalorder %s138, %s141
      %p150 = scmp.eq.s32.totalorder %s23, 1
      %p151 = por %p149, %p150
      %p152 = scmp.ne.s32.totalorder %s141, %s142
      %p153 = scmp.eq.s32.totalorder %s23, 0
      %p154 = por %p152, %p153
      %p155 = scmp.ne.s32.totalorder %s141, %s142
      %p156 = scmp.eq.s32.totalorder %s24, 1
      %p157 = por %p155, %p156
      %p159 = scmp.ne.s32.totalorder %s142, %s158
      %p160 = scmp.eq.s32.totalorder %s24, 0
      %p161 = por %p159, %p160
      %p162 = scmp.le.s32.totalorder 1, %s18
      %p163 = scmp.lt.s32.totalorder %s18, 3
      %p164 = pnand %p162, %p163
      %p165 = pneg %p164
      // Predicated region
      $region9: #{tpu_custom_call.1} parent=5 // pred_check
        _
      $region10: #{tpu_custom_call.1} parent=5 // pred_check_branch
        %167 = sbr.rel (%p164) target = $region12
      $region11: #{tpu_custom_call.1} parent=5 // pred_region
        %s168 = ssub.s32 %s18, 1
        // Predicated region
        $region13: #{tpu_custom_call.1} parent=11 // pred_check
          %p169 = pneg %p65
        $region14: #{tpu_custom_call.1} parent=11 // pred_check_branch
          %171 = sbr.rel (%p169) target = $region16
        $region15: #{tpu_custom_call.1} parent=11 // pred_region
          _
        $region16: #{tpu_custom_call.1} parent=11 // pred_fallthru
          _
        // Predicated region
        $region17: #{tpu_custom_call.1} parent=11 // pred_check
          %p172 = pneg %p86
        $region18: #{tpu_custom_call.1} parent=11 // pred_check_branch
          %174 = sbr.rel (%p172) target = $region20
        $region19: #{tpu_custom_call.1} parent=11 // pred_region
          _
        $region20: #{tpu_custom_call.1} parent=11 // pred_fallthru
          _
        // Predicated region
        $region21: #{tpu_custom_call.1} parent=11 // pred_check
          %p175 = pneg %p107
        $region22: #{tpu_custom_call.1} parent=11 // pred_check_branch
          %177 = sbr.rel (%p175) target = $region24
        $region23: #{tpu_custom_call.1} parent=11 // pred_region
          %s179 = ssub.s32 4096, 4096
          %180 = vsyncadd [#allocation6], %s179
          %s181 = sshll.u32 [#allocation5], 4
          %s182 = int_to_ptr.vmem [resolvable:$true] %s181
          %187 = dma.hbm_to_vmem [thread:$0]  %s3, 4096, %s182, [#allocation6], 128, 128, 8
        $region24: #{tpu_custom_call.1} parent=11 // pred_fallthru
          _
        // Predicated region
        $region25: #{tpu_custom_call.1} parent=11 // pred_check
          %p188 = pneg %p128
        $region26: #{tpu_custom_call.1} parent=11 // pred_check_branch
          %190 = sbr.rel (%p188) target = $region28
        $region27: #{tpu_custom_call.1} parent=11 // pred_region
          _
        $region28: #{tpu_custom_call.1} parent=11 // pred_fallthru
          _
      $region12: #{tpu_custom_call.1} parent=5 // pred_fallthru
        _
      %p191 = scmp.lt.s32.totalorder %s18, 2
      // Predicated region
      $region29: #{tpu_custom_call.1} parent=5 // pred_check
        %p192 = pneg %p191
      $region30: #{tpu_custom_call.1} parent=5 // pred_check_branch
        %194 = sbr.rel (%p192) target = $region32
      $region31: #{tpu_custom_call.1} parent=5 // pred_region
        // Predicated region
        $region33: #{tpu_custom_call.1} parent=31 // pred_check
          %p195 = pneg %p38
        $region34: #{tpu_custom_call.1} parent=31 // pred_check_branch
          %197 = sbr.rel (%p195) target = $region36
        $region35: #{tpu_custom_call.1} parent=31 // pred_region
          %s198 = sand.u32 %s28, 1
          %s199 = scalar_lea.sflag [#allocation3], %s198
          %s200 = sand.u32 %s28, 1
          %s201 = smul.addr %s200, 1024
          %s202 = scalar_lea.vmem [#allocation2], %s201
          %s203 = smul.u32 64, %s18
          %s205 = ssub.s32 16384, 16384
          %206 = vsyncadd %s199, %s205
          %s207 = smul.addr %s203, 2
          %s208 = smul.addr %s207, 128
          %s209 = scalar_lea.hbm %s0, %s208
          %s210 = sshll.u32 %s202, 4
          %s211 = int_to_ptr.vmem [resolvable:$true] %s210
          %216 = dma.hbm_to_vmem [thread:$0]  %s209, 16384, %s211, %s199, 256, 256, 16
        $region36: #{tpu_custom_call.1} parent=31 // pred_fallthru
          _
      $region32: #{tpu_custom_call.1} parent=5 // pred_fallthru
        _
      %p217 = scmp.le.s32.totalorder 1, %s18
      %p218 = scmp.lt.s32.totalorder %s18, 3
      %p219 = pnand %p217, %p218
      %p220 = pneg %p219
      // Predicated region
      $region37: #{tpu_custom_call.1} parent=5 // pred_check
        _
      $region38: #{tpu_custom_call.1} parent=5 // pred_check_branch
        %222 = sbr.rel (%p219) target = $region40
      $region39: #{tpu_custom_call.1} parent=5 // pred_region
        %s223 = ssub.s32 %s18, 1
        %s224 = sand.u32 %s31, 1
        %s225 = scalar_lea.sflag [#allocation3], %s224
        %s226 = sand.u32 %s31, 1
        %s227 = smul.addr %s226, 1024
        %s228 = scalar_lea.vmem [#allocation2], %s227
        // Predicated region
        $region41: #{tpu_custom_call.1} parent=39 // pred_check
          %p229 = pneg %p44
        $region42: #{tpu_custom_call.1} parent=39 // pred_check_branch
          %231 = sbr.rel (%p229) target = $region44
        $region43: #{tpu_custom_call.1} parent=39 // pred_region
          %232 = dma.done %s225, 16384
        $region44: #{tpu_custom_call.1} parent=39 // pred_fallthru
          _
        // Predicated region
        $region45: #{tpu_custom_call.1} parent=39 // pred_check
          %p233 = pneg %p107
        $region46: #{tpu_custom_call.1} parent=39 // pred_check_branch
          %235 = sbr.rel (%p233) target = $region48
        $region47: #{tpu_custom_call.1} parent=39 // pred_region
          %236 = dma.done [#allocation6], 4096
        $region48: #{tpu_custom_call.1} parent=39 // pred_fallthru
          _
        %s237 = sand.u32 %s31, 1
        %s238 = scalar_lea.sflag [#allocation3], %s237
        %s239 = sand.u32 %s31, 1
        %s240 = smul.addr %s239, 1024
        %s241 = scalar_lea.vmem [#allocation2], %s240
        %p242 = pneg %p44
        %p243 = pneg %p41
        %p244 = pneg %p65
        %p245 = pneg %p62
        %p246 = pneg %p86
        %p247 = pneg %p83
        %p248 = pneg %p107
        %p249 = pneg %p104
        %p250 = pneg %p128
        %p251 = pneg %p125
        %p252 = pneg %p154
        %p253 = pneg %p151
        %s254 = sand.u32 %s141, 1
        %s255 = scalar_lea.sflag [#allocation4], %s254
        %s256 = sand.u32 %s141, 1
        %s257 = smul.addr %s256, 1024
        %s258 = scalar_lea.vmem [#allocation7], %s257
        %s259 = smul.u32 64, %s23
        %s260 = smul.u32 64, %s23
        %v261 = vld [vmem:[%s228] sm:$0xff]
        %v262 = vld [vmem:[%s228 + $0x8] sm:$0xff]
        %v263 = vld [vmem:[%s228 + $0x10] sm:$0xff]
        %v264 = vld [vmem:[%s228 + $0x18] sm:$0xff]
        %v265 = vld [vmem:[%s228 + $0x20] sm:$0xff]
        %v266 = vld [vmem:[%s228 + $0x28] sm:$0xff]
        %v267 = vld [vmem:[%s228 + $0x30] sm:$0xff]
        %v268 = vld [vmem:[%s228 + $0x38] sm:$0xff]
        %v269 = vld [vmem:[%s228 + $0x40] sm:$0xff]
        %v270 = vld [vmem:[%s228 + $0x48] sm:$0xff]
        %v271 = vld [vmem:[%s228 + $0x50] sm:$0xff]
        %v272 = vld [vmem:[%s228 + $0x58] sm:$0xff]
        %v273 = vld [vmem:[%s228 + $0x60] sm:$0xff]
        %v274 = vld [vmem:[%s228 + $0x68] sm:$0xff]
        %v275 = vld [vmem:[%s228 + $0x70] sm:$0xff]
        %v276 = vld [vmem:[%s228 + $0x78] sm:$0xff]
        %v277 = vld [vmem:[%s228 + $0x80] sm:$0xff]
        %v278 = vld [vmem:[%s228 + $0x88] sm:$0xff]
        %v279 = vld [vmem:[%s228 + $0x90] sm:$0xff]
        %v280 = vld [vmem:[%s228 + $0x98] sm:$0xff]
        %v281 = vld [vmem:[%s228 + $0xa0] sm:$0xff]
        %v282 = vld [vmem:[%s228 + $0xa8] sm:$0xff]
        %v283 = vld [vmem:[%s228 + $0xb0] sm:$0xff]
        %v284 = vld [vmem:[%s228 + $0xb8] sm:$0xff]
        %v285 = vld [vmem:[%s228 + $0xc0] sm:$0xff]
        %v286 = vld [vmem:[%s228 + $0xc8] sm:$0xff]
        %v287 = vld [vmem:[%s228 + $0xd0] sm:$0xff]
        %v288 = vld [vmem:[%s228 + $0xd8] sm:$0xff]
        %v289 = vld [vmem:[%s228 + $0xe0] sm:$0xff]
        %v290 = vld [vmem:[%s228 + $0xe8] sm:$0xff]
        %v291 = vld [vmem:[%s228 + $0xf0] sm:$0xff]
        %v292 = vld [vmem:[%s228 + $0xf8] sm:$0xff]
        %v293 = vld [vmem:[%s228 + $0x100] sm:$0xff]
        %v294 = vld [vmem:[%s228 + $0x108] sm:$0xff]
        %v295 = vld [vmem:[%s228 + $0x110] sm:$0xff]
        %v296 = vld [vmem:[%s228 + $0x118] sm:$0xff]
        %v297 = vld [vmem:[%s228 + $0x120] sm:$0xff]
        %v298 = vld [vmem:[%s228 + $0x128] sm:$0xff]
        %v299 = vld [vmem:[%s228 + $0x130] sm:$0xff]
        %v300 = vld [vmem:[%s228 + $0x138] sm:$0xff]
        %v301 = vld [vmem:[%s228 + $0x140] sm:$0xff]
        %v302 = vld [vmem:[%s228 + $0x148] sm:$0xff]
        %v303 = vld [vmem:[%s228 + $0x150] sm:$0xff]
        %v304 = vld [vmem:[%s228 + $0x158] sm:$0xff]
        %v305 = vld [vmem:[%s228 + $0x160] sm:$0xff]
        %v306 = vld [vmem:[%s228 + $0x168] sm:$0xff]
        %v307 = vld [vmem:[%s228 + $0x170] sm:$0xff]
        %v308 = vld [vmem:[%s228 + $0x178] sm:$0xff]
        %v309 = vld [vmem:[%s228 + $0x180] sm:$0xff]
        %v310 = vld [vmem:[%s228 + $0x188] sm:$0xff]
        %v311 = vld [vmem:[%s228 + $0x190] sm:$0xff]
        %v312 = vld [vmem:[%s228 + $0x198] sm:$0xff]
        %v313 = vld [vmem:[%s228 + $0x1a0] sm:$0xff]
        %v314 = vld [vmem:[%s228 + $0x1a8] sm:$0xff]
        %v315 = vld [vmem:[%s228 + $0x1b0] sm:$0xff]
        %v316 = vld [vmem:[%s228 + $0x1b8] sm:$0xff]
        %v317 = vld [vmem:[%s228 + $0x1c0] sm:$0xff]
        %v318 = vld [vmem:[%s228 + $0x1c8] sm:$0xff]
        %v319 = vld [vmem:[%s228 + $0x1d0] sm:$0xff]
        %v320 = vld [vmem:[%s228 + $0x1d8] sm:$0xff]
        %v321 = vld [vmem:[%s228 + $0x1e0] sm:$0xff]
        %v322 = vld [vmem:[%s228 + $0x1e8] sm:$0xff]
        %v323 = vld [vmem:[%s228 + $0x1f0] sm:$0xff]
        %v324 = vld [vmem:[%s228 + $0x1f8] sm:$0xff]
        %v325 = vld [vmem:[%s228 + $0x200] sm:$0xff]
        %v326 = vld [vmem:[%s228 + $0x208] sm:$0xff]
        %v327 = vld [vmem:[%s228 + $0x210] sm:$0xff]
        %v328 = vld [vmem:[%s228 + $0x218] sm:$0xff]
        %v329 = vld [vmem:[%s228 + $0x220] sm:$0xff]
        %v330 = vld [vmem:[%s228 + $0x228] sm:$0xff]
        %v331 = vld [vmem:[%s228 + $0x230] sm:$0xff]
        %v332 = vld [vmem:[%s228 + $0x238] sm:$0xff]
        %v333 = vld [vmem:[%s228 + $0x240] sm:$0xff]
        %v334 = vld [vmem:[%s228 + $0x248] sm:$0xff]
        %v335 = vld [vmem:[%s228 + $0x250] sm:$0xff]
        %v336 = vld [vmem:[%s228 + $0x258] sm:$0xff]
        %v337 = vld [vmem:[%s228 + $0x260] sm:$0xff]
        %v338 = vld [vmem:[%s228 + $0x268] sm:$0xff]
        %v339 = vld [vmem:[%s228 + $0x270] sm:$0xff]
        %v340 = vld [vmem:[%s228 + $0x278] sm:$0xff]
        %v341 = vld [vmem:[%s228 + $0x280] sm:$0xff]
        %v342 = vld [vmem:[%s228 + $0x288] sm:$0xff]
        %v343 = vld [vmem:[%s228 + $0x290] sm:$0xff]
        %v344 = vld [vmem:[%s228 + $0x298] sm:$0xff]
        %v345 = vld [vmem:[%s228 + $0x2a0] sm:$0xff]
        %v346 = vld [vmem:[%s228 + $0x2a8] sm:$0xff]
        %v347 = vld [vmem:[%s228 + $0x2b0] sm:$0xff]
        %v348 = vld [vmem:[%s228 + $0x2b8] sm:$0xff]
        %v349 = vld [vmem:[%s228 + $0x2c0] sm:$0xff]
        %v350 = vld [vmem:[%s228 + $0x2c8] sm:$0xff]
        %v351 = vld [vmem:[%s228 + $0x2d0] sm:$0xff]
        %v352 = vld [vmem:[%s228 + $0x2d8] sm:$0xff]
        %v353 = vld [vmem:[%s228 + $0x2e0] sm:$0xff]
        %v354 = vld [vmem:[%s228 + $0x2e8] sm:$0xff]
        %v355 = vld [vmem:[%s228 + $0x2f0] sm:$0xff]
        %v356 = vld [vmem:[%s228 + $0x2f8] sm:$0xff]
        %v357 = vld [vmem:[%s228 + $0x300] sm:$0xff]
        %v358 = vld [vmem:[%s228 + $0x308] sm:$0xff]
        %v359 = vld [vmem:[%s228 + $0x310] sm:$0xff]
        %v360 = vld [vmem:[%s228 + $0x318] sm:$0xff]
        %v361 = vld [vmem:[%s228 + $0x320] sm:$0xff]
        %v362 = vld [vmem:[%s228 + $0x328] sm:$0xff]
        %v363 = vld [vmem:[%s228 + $0x330] sm:$0xff]
        %v364 = vld [vmem:[%s228 + $0x338] sm:$0xff]
        %v365 = vld [vmem:[%s228 + $0x340] sm:$0xff]
        %v366 = vld [vmem:[%s228 + $0x348] sm:$0xff]
        %v367 = vld [vmem:[%s228 + $0x350] sm:$0xff]
        %v368 = vld [vmem:[%s228 + $0x358] sm:$0xff]
        %v369 = vld [vmem:[%s228 + $0x360] sm:$0xff]
        %v370 = vld [vmem:[%s228 + $0x368] sm:$0xff]
        %v371 = vld [vmem:[%s228 + $0x370] sm:$0xff]
        %v372 = vld [vmem:[%s228 + $0x378] sm:$0xff]
        %v373 = vld [vmem:[%s228 + $0x380] sm:$0xff]
        %v374 = vld [vmem:[%s228 + $0x388] sm:$0xff]
        %v375 = vld [vmem:[%s228 + $0x390] sm:$0xff]
        %v376 = vld [vmem:[%s228 + $0x398] sm:$0xff]
        %v377 = vld [vmem:[%s228 + $0x3a0] sm:$0xff]
        %v378 = vld [vmem:[%s228 + $0x3a8] sm:$0xff]
        %v379 = vld [vmem:[%s228 + $0x3b0] sm:$0xff]
        %v380 = vld [vmem:[%s228 + $0x3b8] sm:$0xff]
        %v381 = vld [vmem:[%s228 + $0x3c0] sm:$0xff]
        %v382 = vld [vmem:[%s228 + $0x3c8] sm:$0xff]
        %v383 = vld [vmem:[%s228 + $0x3d0] sm:$0xff]
        %v384 = vld [vmem:[%s228 + $0x3d8] sm:$0xff]
        %v385 = vld [vmem:[%s228 + $0x3e0] sm:$0xff]
        %v386 = vld [vmem:[%s228 + $0x3e8] sm:$0xff]
        %v387 = vld [vmem:[%s228 + $0x3f0] sm:$0xff]
        %v388 = vld [vmem:[%s228 + $0x3f8] sm:$0xff]
        %v389 = vld [vmem:[%s1] sm:$0x3]
        %v390 = vld [vmem:[%s2] sm:$0x3]
        %v391 = vadd.f32 %v261, %v262
        %392 = vadd.xlane.f32.xlu0 %v391
        %v393 = vpop.xlane.xlu0 %392
        %v394 = vadd.f32 %v263, %v264
        %395 = vadd.xlane.f32.xlu0 %v394
        %v396 = vpop.xlane.xlu0 %395
        %v397 = vadd.f32 %v265, %v266
        %398 = vadd.xlane.f32.xlu0 %v397
        %v399 = vpop.xlane.xlu0 %398
        %v400 = vadd.f32 %v267, %v268
        %401 = vadd.xlane.f32.xlu0 %v400
        %v402 = vpop.xlane.xlu0 %401
        %v403 = vadd.f32 %v269, %v270
        %404 = vadd.xlane.f32.xlu0 %v403
        %v405 = vpop.xlane.xlu0 %404
        %v406 = vadd.f32 %v271, %v272
        %407 = vadd.xlane.f32.xlu0 %v406
        %v408 = vpop.xlane.xlu0 %407
        %v409 = vadd.f32 %v273, %v274
        %410 = vadd.xlane.f32.xlu0 %v409
        %v411 = vpop.xlane.xlu0 %410
        %v412 = vadd.f32 %v275, %v276
        %413 = vadd.xlane.f32.xlu0 %v412
        %v414 = vpop.xlane.xlu0 %413
        %v415 = vadd.f32 %v277, %v278
        %416 = vadd.xlane.f32.xlu0 %v415
        %v417 = vpop.xlane.xlu0 %416
        %v418 = vadd.f32 %v279, %v280
        %419 = vadd.xlane.f32.xlu0 %v418
        %v420 = vpop.xlane.xlu0 %419
        %v421 = vadd.f32 %v281, %v282
        %422 = vadd.xlane.f32.xlu0 %v421
        %v423 = vpop.xlane.xlu0 %422
        %v424 = vadd.f32 %v283, %v284
        %425 = vadd.xlane.f32.xlu0 %v424
        %v426 = vpop.xlane.xlu0 %425
        %v427 = vadd.f32 %v285, %v286
        %428 = vadd.xlane.f32.xlu0 %v427
        %v429 = vpop.xlane.xlu0 %428
        %v430 = vadd.f32 %v287, %v288
        %431 = vadd.xlane.f32.xlu0 %v430
        %v432 = vpop.xlane.xlu0 %431
        %v433 = vadd.f32 %v289, %v290
        %434 = vadd.xlane.f32.xlu0 %v433
        %v435 = vpop.xlane.xlu0 %434
        %v436 = vadd.f32 %v291, %v292
        %437 = vadd.xlane.f32.xlu0 %v436
        %v438 = vpop.xlane.xlu0 %437
        %v439 = vadd.f32 %v293, %v294
        %440 = vadd.xlane.f32.xlu0 %v439
        %v441 = vpop.xlane.xlu0 %440
        %v442 = vadd.f32 %v295, %v296
        %443 = vadd.xlane.f32.xlu0 %v442
        %v444 = vpop.xlane.xlu0 %443
        %v445 = vadd.f32 %v297, %v298
        %446 = vadd.xlane.f32.xlu0 %v445
        %v447 = vpop.xlane.xlu0 %446
        %v448 = vadd.f32 %v299, %v300
        %449 = vadd.xlane.f32.xlu0 %v448
        %v450 = vpop.xlane.xlu0 %449
        %v451 = vadd.f32 %v301, %v302
        %452 = vadd.xlane.f32.xlu0 %v451
        %v453 = vpop.xlane.xlu0 %452
        %v454 = vadd.f32 %v303, %v304
        %455 = vadd.xlane.f32.xlu0 %v454
        %v456 = vpop.xlane.xlu0 %455
        %v457 = vadd.f32 %v305, %v306
        %458 = vadd.xlane.f32.xlu0 %v457
        %v459 = vpop.xlane.xlu0 %458
        %v460 = vadd.f32 %v307, %v308
        %461 = vadd.xlane.f32.xlu0 %v460
        %v462 = vpop.xlane.xlu0 %461
        %v463 = vadd.f32 %v309, %v310
        %464 = vadd.xlane.f32.xlu0 %v463
        %v465 = vpop.xlane.xlu0 %464
        %v466 = vadd.f32 %v311, %v312
        %467 = vadd.xlane.f32.xlu0 %v466
        %v468 = vpop.xlane.xlu0 %467
        %v469 = vadd.f32 %v313, %v314
        %470 = vadd.xlane.f32.xlu0 %v469
        %v471 = vpop.xlane.xlu0 %470
        %v472 = vadd.f32 %v315, %v316
        %473 = vadd.xlane.f32.xlu0 %v472
        %v474 = vpop.xlane.xlu0 %473
        %v475 = vadd.f32 %v317, %v318
        %476 = vadd.xlane.f32.xlu0 %v475
        %v477 = vpop.xlane.xlu0 %476
        %v478 = vadd.f32 %v319, %v320
        %479 = vadd.xlane.f32.xlu0 %v478
        %v480 = vpop.xlane.xlu0 %479
        %v481 = vadd.f32 %v321, %v322
        %482 = vadd.xlane.f32.xlu0 %v481
        %v483 = vpop.xlane.xlu0 %482
        %v484 = vadd.f32 %v323, %v324
        %485 = vadd.xlane.f32.xlu0 %v484
        %v486 = vpop.xlane.xlu0 %485
        %v487 = vadd.f32 %v325, %v326
        %488 = vadd.xlane.f32.xlu0 %v487
        %v489 = vpop.xlane.xlu0 %488
        %v490 = vadd.f32 %v327, %v328
        %491 = vadd.xlane.f32.xlu0 %v490
        %v492 = vpop.xlane.xlu0 %491
        %v493 = vadd.f32 %v329, %v330
        %494 = vadd.xlane.f32.xlu0 %v493
        %v495 = vpop.xlane.xlu0 %494
        %v496 = vadd.f32 %v331, %v332
        %497 = vadd.xlane.f32.xlu0 %v496
        %v498 = vpop.xlane.xlu0 %497
        %v499 = vadd.f32 %v333, %v334
        %500 = vadd.xlane.f32.xlu0 %v499
        %v501 = vpop.xlane.xlu0 %500
        %v502 = vadd.f32 %v335, %v336
        %503 = vadd.xlane.f32.xlu0 %v502
        %v504 = vpop.xlane.xlu0 %503
        %v505 = vadd.f32 %v337, %v338
        %506 = vadd.xlane.f32.xlu0 %v505
        %v507 = vpop.xlane.xlu0 %506
        %v508 = vadd.f32 %v339, %v340
        %509 = vadd.xlane.f32.xlu0 %v508
        %v510 = vpop.xlane.xlu0 %509
        %v511 = vadd.f32 %v341, %v342
        %512 = vadd.xlane.f32.xlu0 %v511
        %v513 = vpop.xlane.xlu0 %512
        %v514 = vadd.f32 %v343, %v344
        %515 = vadd.xlane.f32.xlu0 %v514
        %v516 = vpop.xlane.xlu0 %515
        %v517 = vadd.f32 %v345, %v346
        %518 = vadd.xlane.f32.xlu0 %v517
        %v519 = vpop.xlane.xlu0 %518
        %v520 = vadd.f32 %v347, %v348
        %521 = vadd.xlane.f32.xlu0 %v520
        %v522 = vpop.xlane.xlu0 %521
        %v523 = vadd.f32 %v349, %v350
        %524 = vadd.xlane.f32.xlu0 %v523
        %v525 = vpop.xlane.xlu0 %524
        %v526 = vadd.f32 %v351, %v352
        %527 = vadd.xlane.f32.xlu0 %v526
        %v528 = vpop.xlane.xlu0 %527
        %v529 = vadd.f32 %v353, %v354
        %530 = vadd.xlane.f32.xlu0 %v529
        %v531 = vpop.xlane.xlu0 %530
        %v532 = vadd.f32 %v355, %v356
        %533 = vadd.xlane.f32.xlu0 %v532
        %v534 = vpop.xlane.xlu0 %533
        %v535 = vadd.f32 %v357, %v358
        %536 = vadd.xlane.f32.xlu0 %v535
        %v537 = vpop.xlane.xlu0 %536
        %v538 = vadd.f32 %v359, %v360
        %539 = vadd.xlane.f32.xlu0 %v538
        %v540 = vpop.xlane.xlu0 %539
        %v541 = vadd.f32 %v361, %v362
        %542 = vadd.xlane.f32.xlu0 %v541
        %v543 = vpop.xlane.xlu0 %542
        %v544 = vadd.f32 %v363, %v364
        %545 = vadd.xlane.f32.xlu0 %v544
        %v546 = vpop.xlane.xlu0 %545
        %v547 = vadd.f32 %v365, %v366
        %548 = vadd.xlane.f32.xlu0 %v547
        %v549 = vpop.xlane.xlu0 %548
        %v550 = vadd.f32 %v367, %v368
        %551 = vadd.xlane.f32.xlu0 %v550
        %v552 = vpop.xlane.xlu0 %551
        %v553 = vadd.f32 %v369, %v370
        %554 = vadd.xlane.f32.xlu0 %v553
        %v555 = vpop.xlane.xlu0 %554
        %v556 = vadd.f32 %v371, %v372
        %557 = vadd.xlane.f32.xlu0 %v556
        %v558 = vpop.xlane.xlu0 %557
        %v559 = vadd.f32 %v373, %v374
        %560 = vadd.xlane.f32.xlu0 %v559
        %v561 = vpop.xlane.xlu0 %560
        %v562 = vadd.f32 %v375, %v376
        %563 = vadd.xlane.f32.xlu0 %v562
        %v564 = vpop.xlane.xlu0 %563
        %v565 = vadd.f32 %v377, %v378
        %566 = vadd.xlane.f32.xlu0 %v565
        %v567 = vpop.xlane.xlu0 %566
        %v568 = vadd.f32 %v379, %v380
        %569 = vadd.xlane.f32.xlu0 %v568
        %v570 = vpop.xlane.xlu0 %569
        %v571 = vadd.f32 %v381, %v382
        %572 = vadd.xlane.f32.xlu0 %v571
        %v573 = vpop.xlane.xlu0 %572
        %v574 = vadd.f32 %v383, %v384
        %575 = vadd.xlane.f32.xlu0 %v574
        %v576 = vpop.xlane.xlu0 %575
        %v577 = vadd.f32 %v385, %v386
        %578 = vadd.xlane.f32.xlu0 %v577
        %v579 = vpop.xlane.xlu0 %578
        %v580 = vadd.f32 %v387, %v388
        %581 = vadd.xlane.f32.xlu0 %v580
        %v582 = vpop.xlane.xlu0 %581
        %v583 = vrcp.pop 256.0
        %v584 = vmul.f32 %v393, %v583
        %v585 = vmul.f32 %v396, %v583
        %v586 = vmul.f32 %v399, %v583
        %v587 = vmul.f32 %v402, %v583
        %v588 = vmul.f32 %v405, %v583
        %v589 = vmul.f32 %v408, %v583
        %v590 = vmul.f32 %v411, %v583
        %v591 = vmul.f32 %v414, %v583
        %v592 = vmul.f32 %v417, %v583
        %v593 = vmul.f32 %v420, %v583
        %v594 = vmul.f32 %v423, %v583
        %v595 = vmul.f32 %v426, %v583
        %v596 = vmul.f32 %v429, %v583
        %v597 = vmul.f32 %v432, %v583
        %v598 = vmul.f32 %v435, %v583
        %v599 = vmul.f32 %v438, %v583
        %v600 = vmul.f32 %v441, %v583
        %v601 = vmul.f32 %v444, %v583
        %v602 = vmul.f32 %v447, %v583
        %v603 = vmul.f32 %v450, %v583
        %v604 = vmul.f32 %v453, %v583
        %v605 = vmul.f32 %v456, %v583
        %v606 = vmul.f32 %v459, %v583
        %v607 = vmul.f32 %v462, %v583
        %v608 = vmul.f32 %v465, %v583
        %v609 = vmul.f32 %v468, %v583
        %v610 = vmul.f32 %v471, %v583
        %v611 = vmul.f32 %v474, %v583
        %v612 = vmul.f32 %v477, %v583
        %v613 = vmul.f32 %v480, %v583
        %v614 = vmul.f32 %v483, %v583
        %v615 = vmul.f32 %v486, %v583
        %v616 = vmul.f32 %v489, %v583
        %v617 = vmul.f32 %v492, %v583
        %v618 = vmul.f32 %v495, %v583
        %v619 = vmul.f32 %v498, %v583
        %v620 = vmul.f32 %v501, %v583
        %v621 = vmul.f32 %v504, %v583
        %v622 = vmul.f32 %v507, %v583
        %v623 = vmul.f32 %v510, %v583
        %v624 = vmul.f32 %v513, %v583
        %v625 = vmul.f32 %v516, %v583
        %v626 = vmul.f32 %v519, %v583
        %v627 = vmul.f32 %v522, %v583
        %v628 = vmul.f32 %v525, %v583
        %v629 = vmul.f32 %v528, %v583
        %v630 = vmul.f32 %v531, %v583
        %v631 = vmul.f32 %v534, %v583
        %v632 = vmul.f32 %v537, %v583
        %v633 = vmul.f32 %v540, %v583
        %v634 = vmul.f32 %v543, %v583
        %v635 = vmul.f32 %v546, %v583
        %v636 = vmul.f32 %v549, %v583
        %v637 = vmul.f32 %v552, %v583
        %v638 = vmul.f32 %v555, %v583
        %v639 = vmul.f32 %v558, %v583
        %v640 = vmul.f32 %v561, %v583
        %v641 = vmul.f32 %v564, %v583
        %v642 = vmul.f32 %v567, %v583
        %v643 = vmul.f32 %v570, %v583
        %v644 = vmul.f32 %v573, %v583
        %v645 = vmul.f32 %v576, %v583
        %v646 = vmul.f32 %v579, %v583
        %v647 = vmul.f32 %v582, %v583
        %v648 = vsub.f32 %v261, %v584
        %v649 = vsub.f32 %v262, %v584
        %v650 = vsub.f32 %v263, %v585
        %v651 = vsub.f32 %v264, %v585
        %v652 = vsub.f32 %v265, %v586
        %v653 = vsub.f32 %v266, %v586
        %v654 = vsub.f32 %v267, %v587
        %v655 = vsub.f32 %v268, %v587
        %v656 = vsub.f32 %v269, %v588
        %v657 = vsub.f32 %v270, %v588
        %v658 = vsub.f32 %v271, %v589
        %v659 = vsub.f32 %v272, %v589
        %v660 = vsub.f32 %v273, %v590
        %v661 = vsub.f32 %v274, %v590
        %v662 = vsub.f32 %v275, %v591
        %v663 = vsub.f32 %v276, %v591
        %v664 = vsub.f32 %v277, %v592
        %v665 = vsub.f32 %v278, %v592
        %v666 = vsub.f32 %v279, %v593
        %v667 = vsub.f32 %v280, %v593
        %v668 = vsub.f32 %v281, %v594
        %v669 = vsub.f32 %v282, %v594
        %v670 = vsub.f32 %v283, %v595
        %v671 = vsub.f32 %v284, %v595
        %v672 = vsub.f32 %v285, %v596
        %v673 = vsub.f32 %v286, %v596
        %v674 = vsub.f32 %v287, %v597
        %v675 = vsub.f32 %v288, %v597
        %v676 = vsub.f32 %v289, %v598
        %v677 = vsub.f32 %v290, %v598
        %v678 = vsub.f32 %v291, %v599
        %v679 = vsub.f32 %v292, %v599
        %v680 = vsub.f32 %v293, %v600
        %v681 = vsub.f32 %v294, %v600
        %v682 = vsub.f32 %v295, %v601
        %v683 = vsub.f32 %v296, %v601
        %v684 = vsub.f32 %v297, %v602
        %v685 = vsub.f32 %v298, %v602
        %v686 = vsub.f32 %v299, %v603
        %v687 = vsub.f32 %v300, %v603
        %v688 = vsub.f32 %v301, %v604
        %v689 = vsub.f32 %v302, %v604
        %v690 = vsub.f32 %v303, %v605
        %v691 = vsub.f32 %v304, %v605
        %v692 = vsub.f32 %v305, %v606
        %v693 = vsub.f32 %v306, %v606
        %v694 = vsub.f32 %v307, %v607
        %v695 = vsub.f32 %v308, %v607
        %v696 = vsub.f32 %v309, %v608
        %v697 = vsub.f32 %v310, %v608
        %v698 = vsub.f32 %v311, %v609
        %v699 = vsub.f32 %v312, %v609
        %v700 = vsub.f32 %v313, %v610
        %v701 = vsub.f32 %v314, %v610
        %v702 = vsub.f32 %v315, %v611
        %v703 = vsub.f32 %v316, %v611
        %v704 = vsub.f32 %v317, %v612
        %v705 = vsub.f32 %v318, %v612
        %v706 = vsub.f32 %v319, %v613
        %v707 = vsub.f32 %v320, %v613
        %v708 = vsub.f32 %v321, %v614
        %v709 = vsub.f32 %v322, %v614
        %v710 = vsub.f32 %v323, %v615
        %v711 = vsub.f32 %v324, %v615
        %v712 = vsub.f32 %v325, %v616
        %v713 = vsub.f32 %v326, %v616
        %v714 = vsub.f32 %v327, %v617
        %v715 = vsub.f32 %v328, %v617
        %v716 = vsub.f32 %v329, %v618
        %v717 = vsub.f32 %v330, %v618
        %v718 = vsub.f32 %v331, %v619
        %v719 = vsub.f32 %v332, %v619
        %v720 = vsub.f32 %v333, %v620
        %v721 = vsub.f32 %v334, %v620
        %v722 = vsub.f32 %v335, %v621
        %v723 = vsub.f32 %v336, %v621
        %v724 = vsub.f32 %v337, %v622
        %v725 = vsub.f32 %v338, %v622
        %v726 = vsub.f32 %v339, %v623
        %v727 = vsub.f32 %v340, %v623
        %v728 = vsub.f32 %v341, %v624
        %v729 = vsub.f32 %v342, %v624
        %v730 = vsub.f32 %v343, %v625
        %v731 = vsub.f32 %v344, %v625
        %v732 = vsub.f32 %v345, %v626
        %v733 = vsub.f32 %v346, %v626
        %v734 = vsub.f32 %v347, %v627
        %v735 = vsub.f32 %v348, %v627
        %v736 = vsub.f32 %v349, %v628
        %v737 = vsub.f32 %v350, %v628
        %v738 = vsub.f32 %v351, %v629
        %v739 = vsub.f32 %v352, %v629
        %v740 = vsub.f32 %v353, %v630
        %v741 = vsub.f32 %v354, %v630
        %v742 = vsub.f32 %v355, %v631
        %v743 = vsub.f32 %v356, %v631
        %v744 = vsub.f32 %v357, %v632
        %v745 = vsub.f32 %v358, %v632
        %v746 = vsub.f32 %v359, %v633
        %v747 = vsub.f32 %v360, %v633
        %v748 = vsub.f32 %v361, %v634
        %v749 = vsub.f32 %v362, %v634
        %v750 = vsub.f32 %v363, %v635
        %v751 = vsub.f32 %v364, %v635
        %v752 = vsub.f32 %v365, %v636
        %v753 = vsub.f32 %v366, %v636
        %v754 = vsub.f32 %v367, %v637
        %v755 = vsub.f32 %v368, %v637
        %v756 = vsub.f32 %v369, %v638
        %v757 = vsub.f32 %v370, %v638
        %v758 = vsub.f32 %v371, %v639
        %v759 = vsub.f32 %v372, %v639
        %v760 = vsub.f32 %v373, %v640
        %v761 = vsub.f32 %v374, %v640
        %v762 = vsub.f32 %v375, %v641
        %v763 = vsub.f32 %v376, %v641
        %v764 = vsub.f32 %v377, %v642
        %v765 = vsub.f32 %v378, %v642
        %v766 = vsub.f32 %v379, %v643
        %v767 = vsub.f32 %v380, %v643
        %v768 = vsub.f32 %v381, %v644
        %v769 = vsub.f32 %v382, %v644
        %v770 = vsub.f32 %v383, %v645
        %v771 = vsub.f32 %v384, %v645
        %v772 = vsub.f32 %v385, %v646
        %v773 = vsub.f32 %v386, %v646
        %v774 = vsub.f32 %v387, %v647
        %v775 = vsub.f32 %v388, %v647
        %v776 = vmul.f32 %v648, %v648
        %v777 = vmul.f32 %v649, %v649
        %v778 = vmul.f32 %v650, %v650
        %v779 = vmul.f32 %v651, %v651
        %v780 = vmul.f32 %v652, %v652
        %v781 = vmul.f32 %v653, %v653
        %v782 = vmul.f32 %v654, %v654
        %v783 = vmul.f32 %v655, %v655
        %v784 = vmul.f32 %v656, %v656
        %v785 = vmul.f32 %v657, %v657
        %v786 = vmul.f32 %v658, %v658
        %v787 = vmul.f32 %v659, %v659
        %v788 = vmul.f32 %v660, %v660
        %v789 = vmul.f32 %v661, %v661
        %v790 = vmul.f32 %v662, %v662
        %v791 = vmul.f32 %v663, %v663
        %v792 = vmul.f32 %v664, %v664
        %v793 = vmul.f32 %v665, %v665
        %v794 = vmul.f32 %v666, %v666
        %v795 = vmul.f32 %v667, %v667
        %v796 = vmul.f32 %v668, %v668
        %v797 = vmul.f32 %v669, %v669
        %v798 = vmul.f32 %v670, %v670
        %v799 = vmul.f32 %v671, %v671
        %v800 = vmul.f32 %v672, %v672
        %v801 = vmul.f32 %v673, %v673
        %v802 = vmul.f32 %v674, %v674
        %v803 = vmul.f32 %v675, %v675
        %v804 = vmul.f32 %v676, %v676
        %v805 = vmul.f32 %v677, %v677
        %v806 = vmul.f32 %v678, %v678
        %v807 = vmul.f32 %v679, %v679
        %v808 = vmul.f32 %v680, %v680
        %v809 = vmul.f32 %v681, %v681
        %v810 = vmul.f32 %v682, %v682
        %v811 = vmul.f32 %v683, %v683
        %v812 = vmul.f32 %v684, %v684
        %v813 = vmul.f32 %v685, %v685
        %v814 = vmul.f32 %v686, %v686
        %v815 = vmul.f32 %v687, %v687
        %v816 = vmul.f32 %v688, %v688
        %v817 = vmul.f32 %v689, %v689
        %v818 = vmul.f32 %v690, %v690
        %v819 = vmul.f32 %v691, %v691
        %v820 = vmul.f32 %v692, %v692
        %v821 = vmul.f32 %v693, %v693
        %v822 = vmul.f32 %v694, %v694
        %v823 = vmul.f32 %v695, %v695
        %v824 = vmul.f32 %v696, %v696
        %v825 = vmul.f32 %v697, %v697
        %v826 = vmul.f32 %v698, %v698
        %v827 = vmul.f32 %v699, %v699
        %v828 = vmul.f32 %v700, %v700
        %v829 = vmul.f32 %v701, %v701
        %v830 = vmul.f32 %v702, %v702
        %v831 = vmul.f32 %v703, %v703
        %v832 = vmul.f32 %v704, %v704
        %v833 = vmul.f32 %v705, %v705
        %v834 = vmul.f32 %v706, %v706
        %v835 = vmul.f32 %v707, %v707
        %v836 = vmul.f32 %v708, %v708
        %v837 = vmul.f32 %v709, %v709
        %v838 = vmul.f32 %v710, %v710
        %v839 = vmul.f32 %v711, %v711
        %v840 = vmul.f32 %v712, %v712
        %v841 = vmul.f32 %v713, %v713
        %v842 = vmul.f32 %v714, %v714
        %v843 = vmul.f32 %v715, %v715
        %v844 = vmul.f32 %v716, %v716
        %v845 = vmul.f32 %v717, %v717
        %v846 = vmul.f32 %v718, %v718
        %v847 = vmul.f32 %v719, %v719
        %v848 = vmul.f32 %v720, %v720
        %v849 = vmul.f32 %v721, %v721
        %v850 = vmul.f32 %v722, %v722
        %v851 = vmul.f32 %v723, %v723
        %v852 = vmul.f32 %v724, %v724
        %v853 = vmul.f32 %v725, %v725
        %v854 = vmul.f32 %v726, %v726
        %v855 = vmul.f32 %v727, %v727
        %v856 = vmul.f32 %v728, %v728
        %v857 = vmul.f32 %v729, %v729
        %v858 = vmul.f32 %v730, %v730
        %v859 = vmul.f32 %v731, %v731
        %v860 = vmul.f32 %v732, %v732
        %v861 = vmul.f32 %v733, %v733
        %v862 = vmul.f32 %v734, %v734
        %v863 = vmul.f32 %v735, %v735
        %v864 = vmul.f32 %v736, %v736
        %v865 = vmul.f32 %v737, %v737
        %v866 = vmul.f32 %v738, %v738
        %v867 = vmul.f32 %v739, %v739
        %v868 = vmul.f32 %v740, %v740
        %v869 = vmul.f32 %v741, %v741
        %v870 = vmul.f32 %v742, %v742
        %v871 = vmul.f32 %v743, %v743
        %v872 = vmul.f32 %v744, %v744
        %v873 = vmul.f32 %v745, %v745
        %v874 = vmul.f32 %v746, %v746
        %v875 = vmul.f32 %v747, %v747
        %v876 = vmul.f32 %v748, %v748
        %v877 = vmul.f32 %v749, %v749
        %v878 = vmul.f32 %v750, %v750
        %v879 = vmul.f32 %v751, %v751
        %v880 = vmul.f32 %v752, %v752
        %v881 = vmul.f32 %v753, %v753
        %v882 = vmul.f32 %v754, %v754
        %v883 = vmul.f32 %v755, %v755
        %v884 = vmul.f32 %v756, %v756
        %v885 = vmul.f32 %v757, %v757
        %v886 = vmul.f32 %v758, %v758
        %v887 = vmul.f32 %v759, %v759
        %v888 = vmul.f32 %v760, %v760
        %v889 = vmul.f32 %v761, %v761
        %v890 = vmul.f32 %v762, %v762
        %v891 = vmul.f32 %v763, %v763
        %v892 = vmul.f32 %v764, %v764
        %v893 = vmul.f32 %v765, %v765
        %v894 = vmul.f32 %v766, %v766
        %v895 = vmul.f32 %v767, %v767
        %v896 = vmul.f32 %v768, %v768
        %v897 = vmul.f32 %v769, %v769
        %v898 = vmul.f32 %v770, %v770
        %v899 = vmul.f32 %v771, %v771
        %v900 = vmul.f32 %v772, %v772
        %v901 = vmul.f32 %v773, %v773
        %v902 = vmul.f32 %v774, %v774
        %v903 = vmul.f32 %v775, %v775
        %v904 = vadd.f32 %v776, %v777
        %905 = vadd.xlane.f32.xlu0 %v904
        %v906 = vpop.xlane.xlu0 %905
        %v907 = vadd.f32 %v778, %v779
        %908 = vadd.xlane.f32.xlu0 %v907
        %v909 = vpop.xlane.xlu0 %908
        %v910 = vadd.f32 %v780, %v781
        %911 = vadd.xlane.f32.xlu0 %v910
        %v912 = vpop.xlane.xlu0 %911
        %v913 = vadd.f32 %v782, %v783
        %914 = vadd.xlane.f32.xlu0 %v913
        %v915 = vpop.xlane.xlu0 %914
        %v916 = vadd.f32 %v784, %v785
        %917 = vadd.xlane.f32.xlu0 %v916
        %v918 = vpop.xlane.xlu0 %917
        %v919 = vadd.f32 %v786, %v787
        %920 = vadd.xlane.f32.xlu0 %v919
        %v921 = vpop.xlane.xlu0 %920
        %v922 = vadd.f32 %v788, %v789
        %923 = vadd.xlane.f32.xlu0 %v922
        %v924 = vpop.xlane.xlu0 %923
        %v925 = vadd.f32 %v790, %v791
        %926 = vadd.xlane.f32.xlu0 %v925
        %v927 = vpop.xlane.xlu0 %926
        %v928 = vadd.f32 %v792, %v793
        %929 = vadd.xlane.f32.xlu0 %v928
        %v930 = vpop.xlane.xlu0 %929
        %v931 = vadd.f32 %v794, %v795
        %932 = vadd.xlane.f32.xlu0 %v931
        %v933 = vpop.xlane.xlu0 %932
        %v934 = vadd.f32 %v796, %v797
        %935 = vadd.xlane.f32.xlu0 %v934
        %v936 = vpop.xlane.xlu0 %935
        %v937 = vadd.f32 %v798, %v799
        %938 = vadd.xlane.f32.xlu0 %v937
        %v939 = vpop.xlane.xlu0 %938
        %v940 = vadd.f32 %v800, %v801
        %941 = vadd.xlane.f32.xlu0 %v940
        %v942 = vpop.xlane.xlu0 %941
        %v943 = vadd.f32 %v802, %v803
        %944 = vadd.xlane.f32.xlu0 %v943
        %v945 = vpop.xlane.xlu0 %944
        %v946 = vadd.f32 %v804, %v805
        %947 = vadd.xlane.f32.xlu0 %v946
        %v948 = vpop.xlane.xlu0 %947
        %v949 = vadd.f32 %v806, %v807
        %950 = vadd.xlane.f32.xlu0 %v949
        %v951 = vpop.xlane.xlu0 %950
        %v952 = vadd.f32 %v808, %v809
        %953 = vadd.xlane.f32.xlu0 %v952
        %v954 = vpop.xlane.xlu0 %953
        %v955 = vadd.f32 %v810, %v811
        %956 = vadd.xlane.f32.xlu0 %v955
        %v957 = vpop.xlane.xlu0 %956
        %v958 = vadd.f32 %v812, %v813
        %959 = vadd.xlane.f32.xlu0 %v958
        %v960 = vpop.xlane.xlu0 %959
        %v961 = vadd.f32 %v814, %v815
        %962 = vadd.xlane.f32.xlu0 %v961
        %v963 = vpop.xlane.xlu0 %962
        %v964 = vadd.f32 %v816, %v817
        %965 = vadd.xlane.f32.xlu0 %v964
        %v966 = vpop.xlane.xlu0 %965
        %v967 = vadd.f32 %v818, %v819
        %968 = vadd.xlane.f32.xlu0 %v967
        %v969 = vpop.xlane.xlu0 %968
        %v970 = vadd.f32 %v820, %v821
        %971 = vadd.xlane.f32.xlu0 %v970
        %v972 = vpop.xlane.xlu0 %971
        %v973 = vadd.f32 %v822, %v823
        %974 = vadd.xlane.f32.xlu0 %v973
        %v975 = vpop.xlane.xlu0 %974
        %v976 = vadd.f32 %v824, %v825
        %977 = vadd.xlane.f32.xlu0 %v976
        %v978 = vpop.xlane.xlu0 %977
        %v979 = vadd.f32 %v826, %v827
        %980 = vadd.xlane.f32.xlu0 %v979
        %v981 = vpop.xlane.xlu0 %980
        %v982 = vadd.f32 %v828, %v829
        %983 = vadd.xlane.f32.xlu0 %v982
        %v984 = vpop.xlane.xlu0 %983
        %v985 = vadd.f32 %v830, %v831
        %986 = vadd.xlane.f32.xlu0 %v985
        %v987 = vpop.xlane.xlu0 %986
        %v988 = vadd.f32 %v832, %v833
        %989 = vadd.xlane.f32.xlu0 %v988
        %v990 = vpop.xlane.xlu0 %989
        %v991 = vadd.f32 %v834, %v835
        %992 = vadd.xlane.f32.xlu0 %v991
        %v993 = vpop.xlane.xlu0 %992
        %v994 = vadd.f32 %v836, %v837
        %995 = vadd.xlane.f32.xlu0 %v994
        %v996 = vpop.xlane.xlu0 %995
        %v997 = vadd.f32 %v838, %v839
        %998 = vadd.xlane.f32.xlu0 %v997
        %v999 = vpop.xlane.xlu0 %998
        %v1000 = vadd.f32 %v840, %v841
        %1001 = vadd.xlane.f32.xlu0 %v1000
        %v1002 = vpop.xlane.xlu0 %1001
        %v1003 = vadd.f32 %v842, %v843
        %1004 = vadd.xlane.f32.xlu0 %v1003
        %v1005 = vpop.xlane.xlu0 %1004
        %v1006 = vadd.f32 %v844, %v845
        %1007 = vadd.xlane.f32.xlu0 %v1006
        %v1008 = vpop.xlane.xlu0 %1007
        %v1009 = vadd.f32 %v846, %v847
        %1010 = vadd.xlane.f32.xlu0 %v1009
        %v1011 = vpop.xlane.xlu0 %1010
        %v1012 = vadd.f32 %v848, %v849
        %1013 = vadd.xlane.f32.xlu0 %v1012
        %v1014 = vpop.xlane.xlu0 %1013
        %v1015 = vadd.f32 %v850, %v851
        %1016 = vadd.xlane.f32.xlu0 %v1015
        %v1017 = vpop.xlane.xlu0 %1016
        %v1018 = vadd.f32 %v852, %v853
        %1019 = vadd.xlane.f32.xlu0 %v1018
        %v1020 = vpop.xlane.xlu0 %1019
        %v1021 = vadd.f32 %v854, %v855
        %1022 = vadd.xlane.f32.xlu0 %v1021
        %v1023 = vpop.xlane.xlu0 %1022
        %v1024 = vadd.f32 %v856, %v857
        %1025 = vadd.xlane.f32.xlu0 %v1024
        %v1026 = vpop.xlane.xlu0 %1025
        %v1027 = vadd.f32 %v858, %v859
        %1028 = vadd.xlane.f32.xlu0 %v1027
        %v1029 = vpop.xlane.xlu0 %1028
        %v1030 = vadd.f32 %v860, %v861
        %1031 = vadd.xlane.f32.xlu0 %v1030
        %v1032 = vpop.xlane.xlu0 %1031
        %v1033 = vadd.f32 %v862, %v863
        %1034 = vadd.xlane.f32.xlu0 %v1033
        %v1035 = vpop.xlane.xlu0 %1034
        %v1036 = vadd.f32 %v864, %v865
        %1037 = vadd.xlane.f32.xlu0 %v1036
        %v1038 = vpop.xlane.xlu0 %1037
        %v1039 = vadd.f32 %v866, %v867
        %1040 = vadd.xlane.f32.xlu0 %v1039
        %v1041 = vpop.xlane.xlu0 %1040
        %v1042 = vadd.f32 %v868, %v869
        %1043 = vadd.xlane.f32.xlu0 %v1042
        %v1044 = vpop.xlane.xlu0 %1043
        %v1045 = vadd.f32 %v870, %v871
        %1046 = vadd.xlane.f32.xlu0 %v1045
        %v1047 = vpop.xlane.xlu0 %1046
        %v1048 = vadd.f32 %v872, %v873
        %1049 = vadd.xlane.f32.xlu0 %v1048
        %v1050 = vpop.xlane.xlu0 %1049
        %v1051 = vadd.f32 %v874, %v875
        %1052 = vadd.xlane.f32.xlu0 %v1051
        %v1053 = vpop.xlane.xlu0 %1052
        %v1054 = vadd.f32 %v876, %v877
        %1055 = vadd.xlane.f32.xlu0 %v1054
        %v1056 = vpop.xlane.xlu0 %1055
        %v1057 = vadd.f32 %v878, %v879
        %1058 = vadd.xlane.f32.xlu0 %v1057
        %v1059 = vpop.xlane.xlu0 %1058
        %v1060 = vadd.f32 %v880, %v881
        %1061 = vadd.xlane.f32.xlu0 %v1060
        %v1062 = vpop.xlane.xlu0 %1061
        %v1063 = vadd.f32 %v882, %v883
        %1064 = vadd.xlane.f32.xlu0 %v1063
        %v1065 = vpop.xlane.xlu0 %1064
        %v1066 = vadd.f32 %v884, %v885
        %1067 = vadd.xlane.f32.xlu0 %v1066
        %v1068 = vpop.xlane.xlu0 %1067
        %v1069 = vadd.f32 %v886, %v887
        %1070 = vadd.xlane.f32.xlu0 %v1069
        %v1071 = vpop.xlane.xlu0 %1070
        %v1072 = vadd.f32 %v888, %v889
        %1073 = vadd.xlane.f32.xlu0 %v1072
        %v1074 = vpop.xlane.xlu0 %1073
        %v1075 = vadd.f32 %v890, %v891
        %1076 = vadd.xlane.f32.xlu0 %v1075
        %v1077 = vpop.xlane.xlu0 %1076
        %v1078 = vadd.f32 %v892, %v893
        %1079 = vadd.xlane.f32.xlu0 %v1078
        %v1080 = vpop.xlane.xlu0 %1079
        %v1081 = vadd.f32 %v894, %v895
        %1082 = vadd.xlane.f32.xlu0 %v1081
        %v1083 = vpop.xlane.xlu0 %1082
        %v1084 = vadd.f32 %v896, %v897
        %1085 = vadd.xlane.f32.xlu0 %v1084
        %v1086 = vpop.xlane.xlu0 %1085
        %v1087 = vadd.f32 %v898, %v899
        %1088 = vadd.xlane.f32.xlu0 %v1087
        %v1089 = vpop.xlane.xlu0 %1088
        %v1090 = vadd.f32 %v900, %v901
        %1091 = vadd.xlane.f32.xlu0 %v1090
        %v1092 = vpop.xlane.xlu0 %1091
        %v1093 = vadd.f32 %v902, %v903
        %1094 = vadd.xlane.f32.xlu0 %v1093
        %v1095 = vpop.xlane.xlu0 %1094
        %v1096 = vmul.f32 %v906, %v583
        %v1097 = vmul.f32 %v909, %v583
        %v1098 = vmul.f32 %v912, %v583
        %v1099 = vmul.f32 %v915, %v583
        %v1100 = vmul.f32 %v918, %v583
        %v1101 = vmul.f32 %v921, %v583
        %v1102 = vmul.f32 %v924, %v583
        %v1103 = vmul.f32 %v927, %v583
        %v1104 = vmul.f32 %v930, %v583
        %v1105 = vmul.f32 %v933, %v583
        %v1106 = vmul.f32 %v936, %v583
        %v1107 = vmul.f32 %v939, %v583
        %v1108 = vmul.f32 %v942, %v583
        %v1109 = vmul.f32 %v945, %v583
        %v1110 = vmul.f32 %v948, %v583
        %v1111 = vmul.f32 %v951, %v583
        %v1112 = vmul.f32 %v954, %v583
        %v1113 = vmul.f32 %v957, %v583
        %v1114 = vmul.f32 %v960, %v583
        %v1115 = vmul.f32 %v963, %v583
        %v1116 = vmul.f32 %v966, %v583
        %v1117 = vmul.f32 %v969, %v583
        %v1118 = vmul.f32 %v972, %v583
        %v1119 = vmul.f32 %v975, %v583
        %v1120 = vmul.f32 %v978, %v583
        %v1121 = vmul.f32 %v981, %v583
        %v1122 = vmul.f32 %v984, %v583
        %v1123 = vmul.f32 %v987, %v583
        %v1124 = vmul.f32 %v990, %v583
        %v1125 = vmul.f32 %v993, %v583
        %v1126 = vmul.f32 %v996, %v583
        %v1127 = vmul.f32 %v999, %v583
        %v1128 = vmul.f32 %v1002, %v583
        %v1129 = vmul.f32 %v1005, %v583
        %v1130 = vmul.f32 %v1008, %v583
        %v1131 = vmul.f32 %v1011, %v583
        %v1132 = vmul.f32 %v1014, %v583
        %v1133 = vmul.f32 %v1017, %v583
        %v1134 = vmul.f32 %v1020, %v583
        %v1135 = vmul.f32 %v1023, %v583
        %v1136 = vmul.f32 %v1026, %v583
        %v1137 = vmul.f32 %v1029, %v583
        %v1138 = vmul.f32 %v1032, %v583
        %v1139 = vmul.f32 %v1035, %v583
        %v1140 = vmul.f32 %v1038, %v583
        %v1141 = vmul.f32 %v1041, %v583
        %v1142 = vmul.f32 %v1044, %v583
        %v1143 = vmul.f32 %v1047, %v583
        %v1144 = vmul.f32 %v1050, %v583
        %v1145 = vmul.f32 %v1053, %v583
        %v1146 = vmul.f32 %v1056, %v583
        %v1147 = vmul.f32 %v1059, %v583
        %v1148 = vmul.f32 %v1062, %v583
        %v1149 = vmul.f32 %v1065, %v583
        %v1150 = vmul.f32 %v1068, %v583
        %v1151 = vmul.f32 %v1071, %v583
        %v1152 = vmul.f32 %v1074, %v583
        %v1153 = vmul.f32 %v1077, %v583
        %v1154 = vmul.f32 %v1080, %v583
        %v1155 = vmul.f32 %v1083, %v583
        %v1156 = vmul.f32 %v1086, %v583
        %v1157 = vmul.f32 %v1089, %v583
        %v1158 = vmul.f32 %v1092, %v583
        %v1159 = vmul.f32 %v1095, %v583
        %v1160 = vadd.f32 %v1096, 1e-05
        %v1161 = vadd.f32 %v1097, 1e-05
        %v1162 = vadd.f32 %v1098, 1e-05
        %v1163 = vadd.f32 %v1099, 1e-05
        %v1164 = vadd.f32 %v1100, 1e-05
        %v1165 = vadd.f32 %v1101, 1e-05
        %v1166 = vadd.f32 %v1102, 1e-05
        %v1167 = vadd.f32 %v1103, 1e-05
        %v1168 = vadd.f32 %v1104, 1e-05
        %v1169 = vadd.f32 %v1105, 1e-05
        %v1170 = vadd.f32 %v1106, 1e-05
        %v1171 = vadd.f32 %v1107, 1e-05
        %v1172 = vadd.f32 %v1108, 1e-05
        %v1173 = vadd.f32 %v1109, 1e-05
        %v1174 = vadd.f32 %v1110, 1e-05
        %v1175 = vadd.f32 %v1111, 1e-05
        %v1176 = vadd.f32 %v1112, 1e-05
        %v1177 = vadd.f32 %v1113, 1e-05
        %v1178 = vadd.f32 %v1114, 1e-05
        %v1179 = vadd.f32 %v1115, 1e-05
        %v1180 = vadd.f32 %v1116, 1e-05
        %v1181 = vadd.f32 %v1117, 1e-05
        %v1182 = vadd.f32 %v1118, 1e-05
        %v1183 = vadd.f32 %v1119, 1e-05
        %v1184 = vadd.f32 %v1120, 1e-05
        %v1185 = vadd.f32 %v1121, 1e-05
        %v1186 = vadd.f32 %v1122, 1e-05
        %v1187 = vadd.f32 %v1123, 1e-05
        %v1188 = vadd.f32 %v1124, 1e-05
        %v1189 = vadd.f32 %v1125, 1e-05
        %v1190 = vadd.f32 %v1126, 1e-05
        %v1191 = vadd.f32 %v1127, 1e-05
        %v1192 = vadd.f32 %v1128, 1e-05
        %v1193 = vadd.f32 %v1129, 1e-05
        %v1194 = vadd.f32 %v1130, 1e-05
        %v1195 = vadd.f32 %v1131, 1e-05
        %v1196 = vadd.f32 %v1132, 1e-05
        %v1197 = vadd.f32 %v1133, 1e-05
        %v1198 = vadd.f32 %v1134, 1e-05
        %v1199 = vadd.f32 %v1135, 1e-05
        %v1200 = vadd.f32 %v1136, 1e-05
        %v1201 = vadd.f32 %v1137, 1e-05
        %v1202 = vadd.f32 %v1138, 1e-05
        %v1203 = vadd.f32 %v1139, 1e-05
        %v1204 = vadd.f32 %v1140, 1e-05
        %v1205 = vadd.f32 %v1141, 1e-05
        %v1206 = vadd.f32 %v1142, 1e-05
        %v1207 = vadd.f32 %v1143, 1e-05
        %v1208 = vadd.f32 %v1144, 1e-05
        %v1209 = vadd.f32 %v1145, 1e-05
        %v1210 = vadd.f32 %v1146, 1e-05
        %v1211 = vadd.f32 %v1147, 1e-05
        %v1212 = vadd.f32 %v1148, 1e-05
        %v1213 = vadd.f32 %v1149, 1e-05
        %v1214 = vadd.f32 %v1150, 1e-05
        %v1215 = vadd.f32 %v1151, 1e-05
        %v1216 = vadd.f32 %v1152, 1e-05
        %v1217 = vadd.f32 %v1153, 1e-05
        %v1218 = vadd.f32 %v1154, 1e-05
        %v1219 = vadd.f32 %v1155, 1e-05
        %v1220 = vadd.f32 %v1156, 1e-05
        %v1221 = vadd.f32 %v1157, 1e-05
        %v1222 = vadd.f32 %v1158, 1e-05
        %v1223 = vadd.f32 %v1159, 1e-05
        %v1224 = vrsqrt.pop %v1160
        %v1225 = vrsqrt.pop %v1161
        %v1226 = vrsqrt.pop %v1162
        %v1227 = vrsqrt.pop %v1163
        %v1228 = vrsqrt.pop %v1164
        %v1229 = vrsqrt.pop %v1165
        %v1230 = vrsqrt.pop %v1166
        %v1231 = vrsqrt.pop %v1167
        %v1232 = vrsqrt.pop %v1168
        %v1233 = vrsqrt.pop %v1169
        %v1234 = vrsqrt.pop %v1170
        %v1235 = vrsqrt.pop %v1171
        %v1236 = vrsqrt.pop %v1172
        %v1237 = vrsqrt.pop %v1173
        %v1238 = vrsqrt.pop %v1174
        %v1239 = vrsqrt.pop %v1175
        %v1240 = vrsqrt.pop %v1176
        %v1241 = vrsqrt.pop %v1177
        %v1242 = vrsqrt.pop %v1178
        %v1243 = vrsqrt.pop %v1179
        %v1244 = vrsqrt.pop %v1180
        %v1245 = vrsqrt.pop %v1181
        %v1246 = vrsqrt.pop %v1182
        %v1247 = vrsqrt.pop %v1183
        %v1248 = vrsqrt.pop %v1184
        %v1249 = vrsqrt.pop %v1185
        %v1250 = vrsqrt.pop %v1186
        %v1251 = vrsqrt.pop %v1187
        %v1252 = vrsqrt.pop %v1188
        %v1253 = vrsqrt.pop %v1189
        %v1254 = vrsqrt.pop %v1190
        %v1255 = vrsqrt.pop %v1191
        %v1256 = vrsqrt.pop %v1192
        %v1257 = vrsqrt.pop %v1193
        %v1258 = vrsqrt.pop %v1194
        %v1259 = vrsqrt.pop %v1195
        %v1260 = vrsqrt.pop %v1196
        %v1261 = vrsqrt.pop %v1197
        %v1262 = vrsqrt.pop %v1198
        %v1263 = vrsqrt.pop %v1199
        %v1264 = vrsqrt.pop %v1200
        %v1265 = vrsqrt.pop %v1201
        %v1266 = vrsqrt.pop %v1202
        %v1267 = vrsqrt.pop %v1203
        %v1268 = vrsqrt.pop %v1204
        %v1269 = vrsqrt.pop %v1205
        %v1270 = vrsqrt.pop %v1206
        %v1271 = vrsqrt.pop %v1207
        %v1272 = vrsqrt.pop %v1208
        %v1273 = vrsqrt.pop %v1209
        %v1274 = vrsqrt.pop %v1210
        %v1275 = vrsqrt.pop %v1211
        %v1276 = vrsqrt.pop %v1212
        %v1277 = vrsqrt.pop %v1213
        %v1278 = vrsqrt.pop %v1214
        %v1279 = vrsqrt.pop %v1215
        %v1280 = vrsqrt.pop %v1216
        %v1281 = vrsqrt.pop %v1217
        %v1282 = vrsqrt.pop %v1218
        %v1283 = vrsqrt.pop %v1219
        %v1284 = vrsqrt.pop %v1220
        %v1285 = vrsqrt.pop %v1221
        %v1286 = vrsqrt.pop %v1222
        %v1287 = vrsqrt.pop %v1223
        %v1288 = vmul.f32 %v648, %v1224
        %v1289 = vmul.f32 %v649, %v1224
        %v1290 = vmul.f32 %v650, %v1225
        %v1291 = vmul.f32 %v651, %v1225
        %v1292 = vmul.f32 %v652, %v1226
        %v1293 = vmul.f32 %v653, %v1226
        %v1294 = vmul.f32 %v654, %v1227
        %v1295 = vmul.f32 %v655, %v1227
        %v1296 = vmul.f32 %v656, %v1228
        %v1297 = vmul.f32 %v657, %v1228
        %v1298 = vmul.f32 %v658, %v1229
        %v1299 = vmul.f32 %v659, %v1229
        %v1300 = vmul.f32 %v660, %v1230
        %v1301 = vmul.f32 %v661, %v1230
        %v1302 = vmul.f32 %v662, %v1231
        %v1303 = vmul.f32 %v663, %v1231
        %v1304 = vmul.f32 %v664, %v1232
        %v1305 = vmul.f32 %v665, %v1232
        %v1306 = vmul.f32 %v666, %v1233
        %v1307 = vmul.f32 %v667, %v1233
        %v1308 = vmul.f32 %v668, %v1234
        %v1309 = vmul.f32 %v669, %v1234
        %v1310 = vmul.f32 %v670, %v1235
        %v1311 = vmul.f32 %v671, %v1235
        %v1312 = vmul.f32 %v672, %v1236
        %v1313 = vmul.f32 %v673, %v1236
        %v1314 = vmul.f32 %v674, %v1237
        %v1315 = vmul.f32 %v675, %v1237
        %v1316 = vmul.f32 %v676, %v1238
        %v1317 = vmul.f32 %v677, %v1238
        %v1318 = vmul.f32 %v678, %v1239
        %v1319 = vmul.f32 %v679, %v1239
        %v1320 = vmul.f32 %v680, %v1240
        %v1321 = vmul.f32 %v681, %v1240
        %v1322 = vmul.f32 %v682, %v1241
        %v1323 = vmul.f32 %v683, %v1241
        %v1324 = vmul.f32 %v684, %v1242
        %v1325 = vmul.f32 %v685, %v1242
        %v1326 = vmul.f32 %v686, %v1243
        %v1327 = vmul.f32 %v687, %v1243
        %v1328 = vmul.f32 %v688, %v1244
        %v1329 = vmul.f32 %v689, %v1244
        %v1330 = vmul.f32 %v690, %v1245
        %v1331 = vmul.f32 %v691, %v1245
        %v1332 = vmul.f32 %v692, %v1246
        %v1333 = vmul.f32 %v693, %v1246
        %v1334 = vmul.f32 %v694, %v1247
        %v1335 = vmul.f32 %v695, %v1247
        %v1336 = vmul.f32 %v696, %v1248
        %v1337 = vmul.f32 %v697, %v1248
        %v1338 = vmul.f32 %v698, %v1249
        %v1339 = vmul.f32 %v699, %v1249
        %v1340 = vmul.f32 %v700, %v1250
        %v1341 = vmul.f32 %v701, %v1250
        %v1342 = vmul.f32 %v702, %v1251
        %v1343 = vmul.f32 %v703, %v1251
        %v1344 = vmul.f32 %v704, %v1252
        %v1345 = vmul.f32 %v705, %v1252
        %v1346 = vmul.f32 %v706, %v1253
        %v1347 = vmul.f32 %v707, %v1253
        %v1348 = vmul.f32 %v708, %v1254
        %v1349 = vmul.f32 %v709, %v1254
        %v1350 = vmul.f32 %v710, %v1255
        %v1351 = vmul.f32 %v711, %v1255
        %v1352 = vmul.f32 %v712, %v1256
        %v1353 = vmul.f32 %v713, %v1256
        %v1354 = vmul.f32 %v714, %v1257
        %v1355 = vmul.f32 %v715, %v1257
        %v1356 = vmul.f32 %v716, %v1258
        %v1357 = vmul.f32 %v717, %v1258
        %v1358 = vmul.f32 %v718, %v1259
        %v1359 = vmul.f32 %v719, %v1259
        %v1360 = vmul.f32 %v720, %v1260
        %v1361 = vmul.f32 %v721, %v1260
        %v1362 = vmul.f32 %v722, %v1261
        %v1363 = vmul.f32 %v723, %v1261
        %v1364 = vmul.f32 %v724, %v1262
        %v1365 = vmul.f32 %v725, %v1262
        %v1366 = vmul.f32 %v726, %v1263
        %v1367 = vmul.f32 %v727, %v1263
        %v1368 = vmul.f32 %v728, %v1264
        %v1369 = vmul.f32 %v729, %v1264
        %v1370 = vmul.f32 %v730, %v1265
        %v1371 = vmul.f32 %v731, %v1265
        %v1372 = vmul.f32 %v732, %v1266
        %v1373 = vmul.f32 %v733, %v1266
        %v1374 = vmul.f32 %v734, %v1267
        %v1375 = vmul.f32 %v735, %v1267
        %v1376 = vmul.f32 %v736, %v1268
        %v1377 = vmul.f32 %v737, %v1268
        %v1378 = vmul.f32 %v738, %v1269
        %v1379 = vmul.f32 %v739, %v1269
        %v1380 = vmul.f32 %v740, %v1270
        %v1381 = vmul.f32 %v741, %v1270
        %v1382 = vmul.f32 %v742, %v1271
        %v1383 = vmul.f32 %v743, %v1271
        %v1384 = vmul.f32 %v744, %v1272
        %v1385 = vmul.f32 %v745, %v1272
        %v1386 = vmul.f32 %v746, %v1273
        %v1387 = vmul.f32 %v747, %v1273
        %v1388 = vmul.f32 %v748, %v1274
        %v1389 = vmul.f32 %v749, %v1274
        %v1390 = vmul.f32 %v750, %v1275
        %v1391 = vmul.f32 %v751, %v1275
        %v1392 = vmul.f32 %v752, %v1276
        %v1393 = vmul.f32 %v753, %v1276
        %v1394 = vmul.f32 %v754, %v1277
        %v1395 = vmul.f32 %v755, %v1277
        %v1396 = vmul.f32 %v756, %v1278
        %v1397 = vmul.f32 %v757, %v1278
        %v1398 = vmul.f32 %v758, %v1279
        %v1399 = vmul.f32 %v759, %v1279
        %v1400 = vmul.f32 %v760, %v1280
        %v1401 = vmul.f32 %v761, %v1280
        %v1402 = vmul.f32 %v762, %v1281
        %v1403 = vmul.f32 %v763, %v1281
        %v1404 = vmul.f32 %v764, %v1282
        %v1405 = vmul.f32 %v765, %v1282
        %v1406 = vmul.f32 %v766, %v1283
        %v1407 = vmul.f32 %v767, %v1283
        %v1408 = vmul.f32 %v768, %v1284
        %v1409 = vmul.f32 %v769, %v1284
        %v1410 = vmul.f32 %v770, %v1285
        %v1411 = vmul.f32 %v771, %v1285
        %v1412 = vmul.f32 %v772, %v1286
        %v1413 = vmul.f32 %v773, %v1286
        %v1414 = vmul.f32 %v774, %v1287
        %v1415 = vmul.f32 %v775, %v1287
        %v1417 = vlaneseq
        %v1418 = vshrl.u32 %v1417, 7
        %v1419 = vsub.s32 0, %v1418
        %v1420 = vrot.slane %v389, %v1419
        %v1421 = vlaneseq
        %v1422 = vshrl.u32 %v1421, 7
        %v1423 = vsub.s32 1, %v1422
        %v1424 = vrot.slane %v389, %v1423
        %v1427 = vmul.f32 %v1288, %v1420
        %v1428 = vmul.f32 %v1289, %v1424
        %v1429 = vmul.f32 %v1290, %v1420
        %v1430 = vmul.f32 %v1291, %v1424
        %v1431 = vmul.f32 %v1292, %v1420
        %v1432 = vmul.f32 %v1293, %v1424
        %v1433 = vmul.f32 %v1294, %v1420
        %v1434 = vmul.f32 %v1295, %v1424
        %v1435 = vmul.f32 %v1296, %v1420
        %v1436 = vmul.f32 %v1297, %v1424
        %v1437 = vmul.f32 %v1298, %v1420
        %v1438 = vmul.f32 %v1299, %v1424
        %v1439 = vmul.f32 %v1300, %v1420
        %v1440 = vmul.f32 %v1301, %v1424
        %v1441 = vmul.f32 %v1302, %v1420
        %v1442 = vmul.f32 %v1303, %v1424
        %v1443 = vmul.f32 %v1304, %v1420
        %v1444 = vmul.f32 %v1305, %v1424
        %v1445 = vmul.f32 %v1306, %v1420
        %v1446 = vmul.f32 %v1307, %v1424
        %v1447 = vmul.f32 %v1308, %v1420
        %v1448 = vmul.f32 %v1309, %v1424
        %v1449 = vmul.f32 %v1310, %v1420
        %v1450 = vmul.f32 %v1311, %v1424
        %v1451 = vmul.f32 %v1312, %v1420
        %v1452 = vmul.f32 %v1313, %v1424
        %v1453 = vmul.f32 %v1314, %v1420
        %v1454 = vmul.f32 %v1315, %v1424
        %v1455 = vmul.f32 %v1316, %v1420
        %v1456 = vmul.f32 %v1317, %v1424
        %v1457 = vmul.f32 %v1318, %v1420
        %v1458 = vmul.f32 %v1319, %v1424
        %v1459 = vmul.f32 %v1320, %v1420
        %v1460 = vmul.f32 %v1321, %v1424
        %v1461 = vmul.f32 %v1322, %v1420
        %v1462 = vmul.f32 %v1323, %v1424
        %v1463 = vmul.f32 %v1324, %v1420
        %v1464 = vmul.f32 %v1325, %v1424
        %v1465 = vmul.f32 %v1326, %v1420
        %v1466 = vmul.f32 %v1327, %v1424
        %v1467 = vmul.f32 %v1328, %v1420
        %v1468 = vmul.f32 %v1329, %v1424
        %v1469 = vmul.f32 %v1330, %v1420
        %v1470 = vmul.f32 %v1331, %v1424
        %v1471 = vmul.f32 %v1332, %v1420
        %v1472 = vmul.f32 %v1333, %v1424
        %v1473 = vmul.f32 %v1334, %v1420
        %v1474 = vmul.f32 %v1335, %v1424
        %v1475 = vmul.f32 %v1336, %v1420
        %v1476 = vmul.f32 %v1337, %v1424
        %v1477 = vmul.f32 %v1338, %v1420
        %v1478 = vmul.f32 %v1339, %v1424
        %v1479 = vmul.f32 %v1340, %v1420
        %v1480 = vmul.f32 %v1341, %v1424
        %v1481 = vmul.f32 %v1342, %v1420
        %v1482 = vmul.f32 %v1343, %v1424
        %v1483 = vmul.f32 %v1344, %v1420
        %v1484 = vmul.f32 %v1345, %v1424
        %v1485 = vmul.f32 %v1346, %v1420
        %v1486 = vmul.f32 %v1347, %v1424
        %v1487 = vmul.f32 %v1348, %v1420
        %v1488 = vmul.f32 %v1349, %v1424
        %v1489 = vmul.f32 %v1350, %v1420
        %v1490 = vmul.f32 %v1351, %v1424
        %v1491 = vmul.f32 %v1352, %v1420
        %v1492 = vmul.f32 %v1353, %v1424
        %v1493 = vmul.f32 %v1354, %v1420
        %v1494 = vmul.f32 %v1355, %v1424
        %v1495 = vmul.f32 %v1356, %v1420
        %v1496 = vmul.f32 %v1357, %v1424
        %v1497 = vmul.f32 %v1358, %v1420
        %v1498 = vmul.f32 %v1359, %v1424
        %v1499 = vmul.f32 %v1360, %v1420
        %v1500 = vmul.f32 %v1361, %v1424
        %v1501 = vmul.f32 %v1362, %v1420
        %v1502 = vmul.f32 %v1363, %v1424
        %v1503 = vmul.f32 %v1364, %v1420
        %v1504 = vmul.f32 %v1365, %v1424
        %v1505 = vmul.f32 %v1366, %v1420
        %v1506 = vmul.f32 %v1367, %v1424
        %v1507 = vmul.f32 %v1368, %v1420
        %v1508 = vmul.f32 %v1369, %v1424
        %v1509 = vmul.f32 %v1370, %v1420
        %v1510 = vmul.f32 %v1371, %v1424
        %v1511 = vmul.f32 %v1372, %v1420
        %v1512 = vmul.f32 %v1373, %v1424
        %v1513 = vmul.f32 %v1374, %v1420
        %v1514 = vmul.f32 %v1375, %v1424
        %v1515 = vmul.f32 %v1376, %v1420
        %v1516 = vmul.f32 %v1377, %v1424
        %v1517 = vmul.f32 %v1378, %v1420
        %v1518 = vmul.f32 %v1379, %v1424
        %v1519 = vmul.f32 %v1380, %v1420
        %v1520 = vmul.f32 %v1381, %v1424
        %v1521 = vmul.f32 %v1382, %v1420
        %v1522 = vmul.f32 %v1383, %v1424
        %v1523 = vmul.f32 %v1384, %v1420
        %v1524 = vmul.f32 %v1385, %v1424
        %v1525 = vmul.f32 %v1386, %v1420
        %v1526 = vmul.f32 %v1387, %v1424
        %v1527 = vmul.f32 %v1388, %v1420
        %v1528 = vmul.f32 %v1389, %v1424
        %v1529 = vmul.f32 %v1390, %v1420
        %v1530 = vmul.f32 %v1391, %v1424
        %v1531 = vmul.f32 %v1392, %v1420
        %v1532 = vmul.f32 %v1393, %v1424
        %v1533 = vmul.f32 %v1394, %v1420
        %v1534 = vmul.f32 %v1395, %v1424
        %v1535 = vmul.f32 %v1396, %v1420
        %v1536 = vmul.f32 %v1397, %v1424
        %v1537 = vmul.f32 %v1398, %v1420
        %v1538 = vmul.f32 %v1399, %v1424
        %v1539 = vmul.f32 %v1400, %v1420
        %v1540 = vmul.f32 %v1401, %v1424
        %v1541 = vmul.f32 %v1402, %v1420
        %v1542 = vmul.f32 %v1403, %v1424
        %v1543 = vmul.f32 %v1404, %v1420
        %v1544 = vmul.f32 %v1405, %v1424
        %v1545 = vmul.f32 %v1406, %v1420
        %v1546 = vmul.f32 %v1407, %v1424
        %v1547 = vmul.f32 %v1408, %v1420
        %v1548 = vmul.f32 %v1409, %v1424
        %v1549 = vmul.f32 %v1410, %v1420
        %v1550 = vmul.f32 %v1411, %v1424
        %v1551 = vmul.f32 %v1412, %v1420
        %v1552 = vmul.f32 %v1413, %v1424
        %v1553 = vmul.f32 %v1414, %v1420
        %v1554 = vmul.f32 %v1415, %v1424
        %v1556 = vlaneseq
        %v1557 = vshrl.u32 %v1556, 7
        %v1558 = vsub.s32 0, %v1557
        %v1559 = vrot.slane %v390, %v1558
        %v1560 = vlaneseq
        %v1561 = vshrl.u32 %v1560, 7
        %v1562 = vsub.s32 1, %v1561
        %v1563 = vrot.slane %v390, %v1562
        %v1566 = vadd.f32 %v1427, %v1559
        %v1567 = vadd.f32 %v1428, %v1563
        %v1568 = vadd.f32 %v1429, %v1559
        %v1569 = vadd.f32 %v1430, %v1563
        %v1570 = vadd.f32 %v1431, %v1559
        %v1571 = vadd.f32 %v1432, %v1563
        %v1572 = vadd.f32 %v1433, %v1559
        %v1573 = vadd.f32 %v1434, %v1563
        %v1574 = vadd.f32 %v1435, %v1559
        %v1575 = vadd.f32 %v1436, %v1563
        %v1576 = vadd.f32 %v1437, %v1559
        %v1577 = vadd.f32 %v1438, %v1563
        %v1578 = vadd.f32 %v1439, %v1559
        %v1579 = vadd.f32 %v1440, %v1563
        %v1580 = vadd.f32 %v1441, %v1559
        %v1581 = vadd.f32 %v1442, %v1563
        %v1582 = vadd.f32 %v1443, %v1559
        %v1583 = vadd.f32 %v1444, %v1563
        %v1584 = vadd.f32 %v1445, %v1559
        %v1585 = vadd.f32 %v1446, %v1563
        %v1586 = vadd.f32 %v1447, %v1559
        %v1587 = vadd.f32 %v1448, %v1563
        %v1588 = vadd.f32 %v1449, %v1559
        %v1589 = vadd.f32 %v1450, %v1563
        %v1590 = vadd.f32 %v1451, %v1559
        %v1591 = vadd.f32 %v1452, %v1563
        %v1592 = vadd.f32 %v1453, %v1559
        %v1593 = vadd.f32 %v1454, %v1563
        %v1594 = vadd.f32 %v1455, %v1559
        %v1595 = vadd.f32 %v1456, %v1563
        %v1596 = vadd.f32 %v1457, %v1559
        %v1597 = vadd.f32 %v1458, %v1563
        %v1598 = vadd.f32 %v1459, %v1559
        %v1599 = vadd.f32 %v1460, %v1563
        %v1600 = vadd.f32 %v1461, %v1559
        %v1601 = vadd.f32 %v1462, %v1563
        %v1602 = vadd.f32 %v1463, %v1559
        %v1603 = vadd.f32 %v1464, %v1563
        %v1604 = vadd.f32 %v1465, %v1559
        %v1605 = vadd.f32 %v1466, %v1563
        %v1606 = vadd.f32 %v1467, %v1559
        %v1607 = vadd.f32 %v1468, %v1563
        %v1608 = vadd.f32 %v1469, %v1559
        %v1609 = vadd.f32 %v1470, %v1563
        %v1610 = vadd.f32 %v1471, %v1559
        %v1611 = vadd.f32 %v1472, %v1563
        %v1612 = vadd.f32 %v1473, %v1559
        %v1613 = vadd.f32 %v1474, %v1563
        %v1614 = vadd.f32 %v1475, %v1559
        %v1615 = vadd.f32 %v1476, %v1563
        %v1616 = vadd.f32 %v1477, %v1559
        %v1617 = vadd.f32 %v1478, %v1563
        %v1618 = vadd.f32 %v1479, %v1559
        %v1619 = vadd.f32 %v1480, %v1563
        %v1620 = vadd.f32 %v1481, %v1559
        %v1621 = vadd.f32 %v1482, %v1563
        %v1622 = vadd.f32 %v1483, %v1559
        %v1623 = vadd.f32 %v1484, %v1563
        %v1624 = vadd.f32 %v1485, %v1559
        %v1625 = vadd.f32 %v1486, %v1563
        %v1626 = vadd.f32 %v1487, %v1559
        %v1627 = vadd.f32 %v1488, %v1563
        %v1628 = vadd.f32 %v1489, %v1559
        %v1629 = vadd.f32 %v1490, %v1563
        %v1630 = vadd.f32 %v1491, %v1559
        %v1631 = vadd.f32 %v1492, %v1563
        %v1632 = vadd.f32 %v1493, %v1559
        %v1633 = vadd.f32 %v1494, %v1563
        %v1634 = vadd.f32 %v1495, %v1559
        %v1635 = vadd.f32 %v1496, %v1563
        %v1636 = vadd.f32 %v1497, %v1559
        %v1637 = vadd.f32 %v1498, %v1563
        %v1638 = vadd.f32 %v1499, %v1559
        %v1639 = vadd.f32 %v1500, %v1563
        %v1640 = vadd.f32 %v1501, %v1559
        %v1641 = vadd.f32 %v1502, %v1563
        %v1642 = vadd.f32 %v1503, %v1559
        %v1643 = vadd.f32 %v1504, %v1563
        %v1644 = vadd.f32 %v1505, %v1559
        %v1645 = vadd.f32 %v1506, %v1563
        %v1646 = vadd.f32 %v1507, %v1559
        %v1647 = vadd.f32 %v1508, %v1563
        %v1648 = vadd.f32 %v1509, %v1559
        %v1649 = vadd.f32 %v1510, %v1563
        %v1650 = vadd.f32 %v1511, %v1559
        %v1651 = vadd.f32 %v1512, %v1563
        %v1652 = vadd.f32 %v1513, %v1559
        %v1653 = vadd.f32 %v1514, %v1563
        %v1654 = vadd.f32 %v1515, %v1559
        %v1655 = vadd.f32 %v1516, %v1563
        %v1656 = vadd.f32 %v1517, %v1559
        %v1657 = vadd.f32 %v1518, %v1563
        %v1658 = vadd.f32 %v1519, %v1559
        %v1659 = vadd.f32 %v1520, %v1563
        %v1660 = vadd.f32 %v1521, %v1559
        %v1661 = vadd.f32 %v1522, %v1563
        %v1662 = vadd.f32 %v1523, %v1559
        %v1663 = vadd.f32 %v1524, %v1563
        %v1664 = vadd.f32 %v1525, %v1559
        %v1665 = vadd.f32 %v1526, %v1563
        %v1666 = vadd.f32 %v1527, %v1559
        %v1667 = vadd.f32 %v1528, %v1563
        %v1668 = vadd.f32 %v1529, %v1559
        %v1669 = vadd.f32 %v1530, %v1563
        %v1670 = vadd.f32 %v1531, %v1559
        %v1671 = vadd.f32 %v1532, %v1563
        %v1672 = vadd.f32 %v1533, %v1559
        %v1673 = vadd.f32 %v1534, %v1563
        %v1674 = vadd.f32 %v1535, %v1559
        %v1675 = vadd.f32 %v1536, %v1563
        %v1676 = vadd.f32 %v1537, %v1559
        %v1677 = vadd.f32 %v1538, %v1563
        %v1678 = vadd.f32 %v1539, %v1559
        %v1679 = vadd.f32 %v1540, %v1563
        %v1680 = vadd.f32 %v1541, %v1559
        %v1681 = vadd.f32 %v1542, %v1563
        %v1682 = vadd.f32 %v1543, %v1559
        %v1683 = vadd.f32 %v1544, %v1563
        %v1684 = vadd.f32 %v1545, %v1559
        %v1685 = vadd.f32 %v1546, %v1563
        %v1686 = vadd.f32 %v1547, %v1559
        %v1687 = vadd.f32 %v1548, %v1563
        %v1688 = vadd.f32 %v1549, %v1559
        %v1689 = vadd.f32 %v1550, %v1563
        %v1690 = vadd.f32 %v1551, %v1559
        %v1691 = vadd.f32 %v1552, %v1563
        %v1692 = vadd.f32 %v1553, %v1559
        %v1693 = vadd.f32 %v1554, %v1563
        %v1694 = vpack.c.bf16 %v1568, %v1566
        %v1695 = vpack.c.bf16 %v1569, %v1567
        %v1696 = vpack.c.bf16 %v1572, %v1570
        %v1697 = vpack.c.bf16 %v1573, %v1571
        %v1698 = vpack.c.bf16 %v1576, %v1574
        %v1699 = vpack.c.bf16 %v1577, %v1575
        %v1700 = vpack.c.bf16 %v1580, %v1578
        %v1701 = vpack.c.bf16 %v1581, %v1579
        %v1702 = vpack.c.bf16 %v1584, %v1582
        %v1703 = vpack.c.bf16 %v1585, %v1583
        %v1704 = vpack.c.bf16 %v1588, %v1586
        %v1705 = vpack.c.bf16 %v1589, %v1587
        %v1706 = vpack.c.bf16 %v1592, %v1590
        %v1707 = vpack.c.bf16 %v1593, %v1591
        %v1708 = vpack.c.bf16 %v1596, %v1594
        %v1709 = vpack.c.bf16 %v1597, %v1595
        %v1710 = vpack.c.bf16 %v1600, %v1598
        %v1711 = vpack.c.bf16 %v1601, %v1599
        %v1712 = vpack.c.bf16 %v1604, %v1602
        %v1713 = vpack.c.bf16 %v1605, %v1603
        %v1714 = vpack.c.bf16 %v1608, %v1606
        %v1715 = vpack.c.bf16 %v1609, %v1607
        %v1716 = vpack.c.bf16 %v1612, %v1610
        %v1717 = vpack.c.bf16 %v1613, %v1611
        %v1718 = vpack.c.bf16 %v1616, %v1614
        %v1719 = vpack.c.bf16 %v1617, %v1615
        %v1720 = vpack.c.bf16 %v1620, %v1618
        %v1721 = vpack.c.bf16 %v1621, %v1619
        %v1722 = vpack.c.bf16 %v1624, %v1622
        %v1723 = vpack.c.bf16 %v1625, %v1623
        %v1724 = vpack.c.bf16 %v1628, %v1626
        %v1725 = vpack.c.bf16 %v1629, %v1627
        %v1726 = vpack.c.bf16 %v1632, %v1630
        %v1727 = vpack.c.bf16 %v1633, %v1631
        %v1728 = vpack.c.bf16 %v1636, %v1634
        %v1729 = vpack.c.bf16 %v1637, %v1635
        %v1730 = vpack.c.bf16 %v1640, %v1638
        %v1731 = vpack.c.bf16 %v1641, %v1639
        %v1732 = vpack.c.bf16 %v1644, %v1642
        %v1733 = vpack.c.bf16 %v1645, %v1643
        %v1734 = vpack.c.bf16 %v1648, %v1646
        %v1735 = vpack.c.bf16 %v1649, %v1647
        %v1736 = vpack.c.bf16 %v1652, %v1650
        %v1737 = vpack.c.bf16 %v1653, %v1651
        %v1738 = vpack.c.bf16 %v1656, %v1654
        %v1739 = vpack.c.bf16 %v1657, %v1655
        %v1740 = vpack.c.bf16 %v1660, %v1658
        %v1741 = vpack.c.bf16 %v1661, %v1659
        %v1742 = vpack.c.bf16 %v1664, %v1662
        %v1743 = vpack.c.bf16 %v1665, %v1663
        %v1744 = vpack.c.bf16 %v1668, %v1666
        %v1745 = vpack.c.bf16 %v1669, %v1667
        %v1746 = vpack.c.bf16 %v1672, %v1670
        %v1747 = vpack.c.bf16 %v1673, %v1671
        %v1748 = vpack.c.bf16 %v1676, %v1674
        %v1749 = vpack.c.bf16 %v1677, %v1675
        %v1750 = vpack.c.bf16 %v1680, %v1678
        %v1751 = vpack.c.bf16 %v1681, %v1679
        %v1752 = vpack.c.bf16 %v1684, %v1682
        %v1753 = vpack.c.bf16 %v1685, %v1683
        %v1754 = vpack.c.bf16 %v1688, %v1686
        %v1755 = vpack.c.bf16 %v1689, %v1687
        %v1756 = vpack.c.bf16 %v1692, %v1690
        %v1757 = vpack.c.bf16 %v1693, %v1691
        %v1758 = vld [vmem:[#allocation5] sm:$0xff]
        %v1759 = vld [vmem:[#allocation5 + $0x8] sm:$0xff]
        %v1760 = vld [vmem:[#allocation5 + $0x10] sm:$0xff]
        %v1761 = vld [vmem:[#allocation5 + $0x18] sm:$0xff]
        %v1762 = vld [vmem:[#allocation5 + $0x20] sm:$0xff]
        %v1763 = vld [vmem:[#allocation5 + $0x28] sm:$0xff]
        %v1764 = vld [vmem:[#allocation5 + $0x30] sm:$0xff]
        %v1765 = vld [vmem:[#allocation5 + $0x38] sm:$0xff]
        %v1766 = vld [vmem:[#allocation5 + $0x40] sm:$0xff]
        %v1767 = vld [vmem:[#allocation5 + $0x48] sm:$0xff]
        %v1768 = vld [vmem:[#allocation5 + $0x50] sm:$0xff]
        %v1769 = vld [vmem:[#allocation5 + $0x58] sm:$0xff]
        %v1770 = vld [vmem:[#allocation5 + $0x60] sm:$0xff]
        %v1771 = vld [vmem:[#allocation5 + $0x68] sm:$0xff]
        %v1772 = vld [vmem:[#allocation5 + $0x70] sm:$0xff]
        %v1773 = vld [vmem:[#allocation5 + $0x78] sm:$0xff]
        %v1774 = vld [vmem:[#allocation5 + $0x80] sm:$0xff]
        %v1775 = vld [vmem:[#allocation5 + $0x88] sm:$0xff]
        %v1776 = vld [vmem:[#allocation5 + $0x90] sm:$0xff]
        %v1777 = vld [vmem:[#allocation5 + $0x98] sm:$0xff]
        %v1778 = vld [vmem:[#allocation5 + $0xa0] sm:$0xff]
        %v1779 = vld [vmem:[#allocation5 + $0xa8] sm:$0xff]
        %v1780 = vld [vmem:[#allocation5 + $0xb0] sm:$0xff]
        %v1781 = vld [vmem:[#allocation5 + $0xb8] sm:$0xff]
        %v1782 = vld [vmem:[#allocation5 + $0xc0] sm:$0xff]
        %v1783 = vld [vmem:[#allocation5 + $0xc8] sm:$0xff]
        %v1784 = vld [vmem:[#allocation5 + $0xd0] sm:$0xff]
        %v1785 = vld [vmem:[#allocation5 + $0xd8] sm:$0xff]
        %v1786 = vld [vmem:[#allocation5 + $0xe0] sm:$0xff]
        %v1787 = vld [vmem:[#allocation5 + $0xe8] sm:$0xff]
        %v1788 = vld [vmem:[#allocation5 + $0xf0] sm:$0xff]
        %v1789 = vld [vmem:[#allocation5 + $0xf8] sm:$0xff]
        %v1790 = vld [vmem:[%s4] sm:$0x3]
        %v1792 = vlaneseq
        %v1793 = vshrl.u32 %v1792, 7
        %v1794 = vsub.s32 0, %v1793
        %v1795 = vrot.slane %v1790, %v1794
        %v1796 = vlaneseq
        %v1797 = vshrl.u32 %v1796, 7
        %v1798 = vsub.s32 1, %v1797
        %v1799 = vrot.slane %v1790, %v1798
        %v1834 = vunpack.c.l.b16 %v1758
        %v1835 = vunpack.c.h.b16 %v1758
        %v1836 = vunpack.c.l.b16 %v1759
        %v1837 = vunpack.c.h.b16 %v1759
        %v1838 = vunpack.c.l.b16 %v1760
        %v1839 = vunpack.c.h.b16 %v1760
        %v1840 = vunpack.c.l.b16 %v1761
        %v1841 = vunpack.c.h.b16 %v1761
        %v1842 = vunpack.c.l.b16 %v1762
        %v1843 = vunpack.c.h.b16 %v1762
        %v1844 = vunpack.c.l.b16 %v1763
        %v1845 = vunpack.c.h.b16 %v1763
        %v1846 = vunpack.c.l.b16 %v1764
        %v1847 = vunpack.c.h.b16 %v1764
        %v1848 = vunpack.c.l.b16 %v1765
        %v1849 = vunpack.c.h.b16 %v1765
        %v1850 = vunpack.c.l.b16 %v1766
        %v1851 = vunpack.c.h.b16 %v1766
        %v1852 = vunpack.c.l.b16 %v1767
        %v1853 = vunpack.c.h.b16 %v1767
        %v1854 = vunpack.c.l.b16 %v1768
        %v1855 = vunpack.c.h.b16 %v1768
        %v1856 = vunpack.c.l.b16 %v1769
        %v1857 = vunpack.c.h.b16 %v1769
        %v1858 = vunpack.c.l.b16 %v1770
        %v1859 = vunpack.c.h.b16 %v1770
        %v1860 = vunpack.c.l.b16 %v1771
        %v1861 = vunpack.c.h.b16 %v1771
        %v1862 = vunpack.c.l.b16 %v1772
        %v1863 = vunpack.c.h.b16 %v1772
        %v1864 = vunpack.c.l.b16 %v1773
        %v1865 = vunpack.c.h.b16 %v1773
        %v1866 = vunpack.c.l.b16 %v1774
        %v1867 = vunpack.c.h.b16 %v1774
        %v1868 = vunpack.c.l.b16 %v1775
        %v1869 = vunpack.c.h.b16 %v1775
        %v1870 = vunpack.c.l.b16 %v1776
        %v1871 = vunpack.c.h.b16 %v1776
        %v1872 = vunpack.c.l.b16 %v1777
        %v1873 = vunpack.c.h.b16 %v1777
        %v1874 = vunpack.c.l.b16 %v1778
        %v1875 = vunpack.c.h.b16 %v1778
        %v1876 = vunpack.c.l.b16 %v1779
        %v1877 = vunpack.c.h.b16 %v1779
        %v1878 = vunpack.c.l.b16 %v1780
        %v1879 = vunpack.c.h.b16 %v1780
        %v1880 = vunpack.c.l.b16 %v1781
        %v1881 = vunpack.c.h.b16 %v1781
        %v1882 = vunpack.c.l.b16 %v1782
        %v1883 = vunpack.c.h.b16 %v1782
        %v1884 = vunpack.c.l.b16 %v1783
        %v1885 = vunpack.c.h.b16 %v1783
        %v1886 = vunpack.c.l.b16 %v1784
        %v1887 = vunpack.c.h.b16 %v1784
        %v1888 = vunpack.c.l.b16 %v1785
        %v1889 = vunpack.c.h.b16 %v1785
        %v1890 = vunpack.c.l.b16 %v1786
        %v1891 = vunpack.c.h.b16 %v1786
        %v1892 = vunpack.c.l.b16 %v1787
        %v1893 = vunpack.c.h.b16 %v1787
        %v1894 = vunpack.c.l.b16 %v1788
        %v1895 = vunpack.c.h.b16 %v1788
        %v1896 = vunpack.c.l.b16 %v1789
        %v1897 = vunpack.c.h.b16 %v1789
        %v1898 = vpack.c.b16 %v1836, %v1834
        %v1899 = vpack.c.b16 %v1837, %v1835
        %v1900 = vpack.c.b16 %v1840, %v1838
        %v1901 = vpack.c.b16 %v1841, %v1839
        %v1902 = vpack.c.b16 %v1844, %v1842
        %v1903 = vpack.c.b16 %v1845, %v1843
        %v1904 = vpack.c.b16 %v1848, %v1846
        %v1905 = vpack.c.b16 %v1849, %v1847
        %v1906 = vpack.c.b16 %v1852, %v1850
        %v1907 = vpack.c.b16 %v1853, %v1851
        %v1908 = vpack.c.b16 %v1856, %v1854
        %v1909 = vpack.c.b16 %v1857, %v1855
        %v1910 = vpack.c.b16 %v1860, %v1858
        %v1911 = vpack.c.b16 %v1861, %v1859
        %v1912 = vpack.c.b16 %v1864, %v1862
        %v1913 = vpack.c.b16 %v1865, %v1863
        %v1914 = vpack.c.b16 %v1868, %v1866
        %v1915 = vpack.c.b16 %v1869, %v1867
        %v1916 = vpack.c.b16 %v1872, %v1870
        %v1917 = vpack.c.b16 %v1873, %v1871
        %v1918 = vpack.c.b16 %v1876, %v1874
        %v1919 = vpack.c.b16 %v1877, %v1875
        %v1920 = vpack.c.b16 %v1880, %v1878
        %v1921 = vpack.c.b16 %v1881, %v1879
        %v1922 = vpack.c.b16 %v1884, %v1882
        %v1923 = vpack.c.b16 %v1885, %v1883
        %v1924 = vpack.c.b16 %v1888, %v1886
        %v1925 = vpack.c.b16 %v1889, %v1887
        %v1926 = vpack.c.b16 %v1892, %v1890
        %v1927 = vpack.c.b16 %v1893, %v1891
        %v1928 = vpack.c.b16 %v1896, %v1894
        %v1929 = vpack.c.b16 %v1897, %v1895
        %1962 = vmatprep.subr.bf16.mxu0 %v1899
        %1963 = vmatpush1.bf16.msra.mxu0 %v1898
        %1964 = vmatprep.subr.bf16.mxu0 %v1901
        %1965 = vmatpush1.bf16.msra.mxu0 %v1900
        %1966 = vmatprep.subr.bf16.mxu0 %v1903
        %1967 = vmatpush1.bf16.msra.mxu0 %v1902
        %1968 = vmatprep.subr.bf16.mxu0 %v1905
        %1969 = vmatpush1.bf16.msra.mxu0 %v1904
        %1970 = vmatprep.subr.bf16.mxu0 %v1907
        %1971 = vmatpush1.bf16.msra.mxu0 %v1906
        %1972 = vmatprep.subr.bf16.mxu0 %v1909
        %1973 = vmatpush1.bf16.msra.mxu0 %v1908
        %1974 = vmatprep.subr.bf16.mxu0 %v1911
        %1975 = vmatpush1.bf16.msra.mxu0 %v1910
        %1976 = vmatprep.subr.bf16.mxu0 %v1913
        %1977 = vmatpush1.bf16.msra.mxu0 %v1912
        %1978 = vmatprep.subr.bf16.mxu0 %v1915
        %1979 = vmatpush1.bf16.msra.mxu0 %v1914
        %1980 = vmatprep.subr.bf16.mxu0 %v1917
        %1981 = vmatpush1.bf16.msra.mxu0 %v1916
        %1982 = vmatprep.subr.bf16.mxu0 %v1919
        %1983 = vmatpush1.bf16.msra.mxu0 %v1918
        %1984 = vmatprep.subr.bf16.mxu0 %v1921
        %1985 = vmatpush1.bf16.msra.mxu0 %v1920
        %1986 = vmatprep.subr.bf16.mxu0 %v1923
        %1987 = vmatpush1.bf16.msra.mxu0 %v1922
        %1988 = vmatprep.subr.bf16.mxu0 %v1925
        %1989 = vmatpush1.bf16.msra.mxu0 %v1924
        %1990 = vmatprep.subr.bf16.mxu0 %v1927
        %1991 = vmatpush1.bf16.msra.mxu0 %v1926
        %1992 = vmatprep.subr.bf16.mxu0 %v1929
        %1993 = vmatpush1.bf16.msra.mxu0 %v1928
        %1994 = vmatprep.mubr.bf16.mxu0 %v1695
        %1995 = vmatmul.mubr.bf16.gmra.mrb[0].mxu0 %v1694
        %v1996 = vpop.f32.mrb[0].mxu0
        %v1997 = vadd.f32 %v1795, %v1996
        %v1998 = vpop.f32.mrb[0].mxu0
        %v1999 = vadd.f32 %v1799, %v1998
        %v2000 = vpop.f32.mrb[0].mxu0
        %v2001 = vadd.f32 %v1795, %v2000
        %v2002 = vpop.f32.mrb[0].mxu0
        %v2003 = vadd.f32 %v1799, %v2002
        %2004 = vmatprep.mubr.bf16.mxu0 %v1697
        %2005 = vmatmul.mubr.bf16.gmra.mrb[0].mxu0 %v1696
        %v2006 = vpop.f32.mrb[0].mxu0
        %v2007 = vadd.f32 %v1795, %v2006
        %v2008 = vpop.f32.mrb[0].mxu0
        %v2009 = vadd.f32 %v1799, %v2008
        %v2010 = vpop.f32.mrb[0].mxu0
        %v2011 = vadd.f32 %v1795, %v2010
        %v2012 = vpop.f32.mrb[0].mxu0
        %v2013 = vadd.f32 %v1799, %v2012
        %2014 = vmatprep.mubr.bf16.mxu0 %v1699
        %2015 = vmatmul.mubr.bf16.gmra.mrb[0].mxu0 %v1698
        %v2016 = vpop.f32.mrb[0].mxu0
        %v2017 = vadd.f32 %v1795, %v2016
        %v2018 = vpop.f32.mrb[0].mxu0
        %v2019 = vadd.f32 %v1799, %v2018
        %v2020 = vpop.f32.mrb[0].mxu0
        %v2021 = vadd.f32 %v1795, %v2020
        %v2022 = vpop.f32.mrb[0].mxu0
        %v2023 = vadd.f32 %v1799, %v2022
        %2024 = vmatprep.mubr.bf16.mxu0 %v1701
        %2025 = vmatmul.mubr.bf16.gmra.mrb[0].mxu0 %v1700
        %v2026 = vpop.f32.mrb[0].mxu0
        %v2027 = vadd.f32 %v1795, %v2026
        %v2028 = vpop.f32.mrb[0].mxu0
        %v2029 = vadd.f32 %v1799, %v2028
        %v2030 = vpop.f32.mrb[0].mxu0
        %v2031 = vadd.f32 %v1795, %v2030
        %v2032 = vpop.f32.mrb[0].mxu0
        %v2033 = vadd.f32 %v1799, %v2032
        %2034 = vmatprep.mubr.bf16.mxu0 %v1703
        %2035 = vmatmul.mubr.bf16.gmra.mrb[0].mxu0 %v1702
        %v2036 = vpop.f32.mrb[0].mxu0
        %v2037 = vadd.f32 %v1795, %v2036
        %v2038 = vpop.f32.mrb[0].mxu0
        %v2039 = vadd.f32 %v1799, %v2038
        %v2040 = vpop.f32.mrb[0].mxu0
        %v2041 = vadd.f32 %v1795, %v2040
        %v2042 = vpop.f32.mrb[0].mxu0
        %v2043 = vadd.f32 %v1799, %v2042
        %2044 = vmatprep.mubr.bf16.mxu0 %v1705
        %2045 = vmatmul.mubr.bf16.gmra.mrb[0].mxu0 %v1704
        %v2046 = vpop.f32.mrb[0].mxu0
        %v2047 = vadd.f32 %v1795, %v2046
        %v2048 = vpop.f32.mrb[0].mxu0
        %v2049 = vadd.f32 %v1799, %v2048
        %v2050 = vpop.f32.mrb[0].mxu0
        %v2051 = vadd.f32 %v1795, %v2050
        %v2052 = vpop.f32.mrb[0].mxu0
        %v2053 = vadd.f32 %v1799, %v2052
        %2054 = vmatprep.mubr.bf16.mxu0 %v1707
        %2055 = vmatmul.mubr.bf16.gmra.mrb[0].mxu0 %v1706
        %v2056 = vpop.f32.mrb[0].mxu0
        %v2057 = vadd.f32 %v1795, %v2056
        %v2058 = vpop.f32.mrb[0].mxu0
        %v2059 = vadd.f32 %v1799, %v2058
        %v2060 = vpop.f32.mrb[0].mxu0
        %v2061 = vadd.f32 %v1795, %v2060
        %v2062 = vpop.f32.mrb[0].mxu0
        %v2063 = vadd.f32 %v1799, %v2062
        %2064 = vmatprep.mubr.bf16.mxu0 %v1709
        %2065 = vmatmul.mubr.bf16.gmra.mrb[0].mxu0 %v1708
        %v2066 = vpop.f32.mrb[0].mxu0
        %v2067 = vadd.f32 %v1795, %v2066
        %v2068 = vpop.f32.mrb[0].mxu0
        %v2069 = vadd.f32 %v1799, %v2068
        %v2070 = vpop.f32.mrb[0].mxu0
        %v2071 = vadd.f32 %v1795, %v2070
        %v2072 = vpop.f32.mrb[0].mxu0
        %v2073 = vadd.f32 %v1799, %v2072
        %2074 = vmatprep.mubr.bf16.mxu0 %v1711
        %2075 = vmatmul.mubr.bf16.gmra.mrb[0].mxu0 %v1710
        %v2076 = vpop.f32.mrb[0].mxu0
        %v2077 = vadd.f32 %v1795, %v2076
        %v2078 = vpop.f32.mrb[0].mxu0
        %v2079 = vadd.f32 %v1799, %v2078
        %v2080 = vpop.f32.mrb[0].mxu0
        %v2081 = vadd.f32 %v1795, %v2080
        %v2082 = vpop.f32.mrb[0].mxu0
        %v2083 = vadd.f32 %v1799, %v2082
        %2084 = vmatprep.mubr.bf16.mxu0 %v1713
        %2085 = vmatmul.mubr.bf16.gmra.mrb[0].mxu0 %v1712
        %v2086 = vpop.f32.mrb[0].mxu0
        %v2087 = vadd.f32 %v1795, %v2086
        %v2088 = vpop.f32.mrb[0].mxu0
        %v2089 = vadd.f32 %v1799, %v2088
        %v2090 = vpop.f32.mrb[0].mxu0
        %v2091 = vadd.f32 %v1795, %v2090
        %v2092 = vpop.f32.mrb[0].mxu0
        %v2093 = vadd.f32 %v1799, %v2092
        %2094 = vmatprep.mubr.bf16.mxu0 %v1715
        %2095 = vmatmul.mubr.bf16.gmra.mrb[0].mxu0 %v1714
        %v2096 = vpop.f32.mrb[0].mxu0
        %v2097 = vadd.f32 %v1795, %v2096
        %v2098 = vpop.f32.mrb[0].mxu0
        %v2099 = vadd.f32 %v1799, %v2098
        %v2100 = vpop.f32.mrb[0].mxu0
        %v2101 = vadd.f32 %v1795, %v2100
        %v2102 = vpop.f32.mrb[0].mxu0
        %v2103 = vadd.f32 %v1799, %v2102
        %2104 = vmatprep.mubr.bf16.mxu0 %v1717
        %2105 = vmatmul.mubr.bf16.gmra.mrb[0].mxu0 %v1716
        %v2106 = vpop.f32.mrb[0].mxu0
        %v2107 = vadd.f32 %v1795, %v2106
        %v2108 = vpop.f32.mrb[0].mxu0
        %v2109 = vadd.f32 %v1799, %v2108
        %v2110 = vpop.f32.mrb[0].mxu0
        %v2111 = vadd.f32 %v1795, %v2110
        %v2112 = vpop.f32.mrb[0].mxu0
        %v2113 = vadd.f32 %v1799, %v2112
        %2114 = vmatprep.mubr.bf16.mxu0 %v1719
        %2115 = vmatmul.mubr.bf16.gmra.mrb[0].mxu0 %v1718
        %v2116 = vpop.f32.mrb[0].mxu0
        %v2117 = vadd.f32 %v1795, %v2116
        %v2118 = vpop.f32.mrb[0].mxu0
        %v2119 = vadd.f32 %v1799, %v2118
        %v2120 = vpop.f32.mrb[0].mxu0
        %v2121 = vadd.f32 %v1795, %v2120
        %v2122 = vpop.f32.mrb[0].mxu0
        %v2123 = vadd.f32 %v1799, %v2122
        %2124 = vmatprep.mubr.bf16.mxu0 %v1721
        %2125 = vmatmul.mubr.bf16.gmra.mrb[0].mxu0 %v1720
        %v2126 = vpop.f32.mrb[0].mxu0
        %v2127 = vadd.f32 %v1795, %v2126
        %v2128 = vpop.f32.mrb[0].mxu0
        %v2129 = vadd.f32 %v1799, %v2128
        %v2130 = vpop.f32.mrb[0].mxu0
        %v2131 = vadd.f32 %v1795, %v2130
        %v2132 = vpop.f32.mrb[0].mxu0
        %v2133 = vadd.f32 %v1799, %v2132
        %2134 = vmatprep.mubr.bf16.mxu0 %v1723
        %2135 = vmatmul.mubr.bf16.gmra.mrb[0].mxu0 %v1722
        %v2136 = vpop.f32.mrb[0].mxu0
        %v2137 = vadd.f32 %v1795, %v2136
        %v2138 = vpop.f32.mrb[0].mxu0
        %v2139 = vadd.f32 %v1799, %v2138
        %v2140 = vpop.f32.mrb[0].mxu0
        %v2141 = vadd.f32 %v1795, %v2140
        %v2142 = vpop.f32.mrb[0].mxu0
        %v2143 = vadd.f32 %v1799, %v2142
        %2144 = vmatprep.mubr.bf16.mxu0 %v1725
        %2145 = vmatmul.mubr.bf16.gmra.mrb[0].mxu0 %v1724
        %v2146 = vpop.f32.mrb[0].mxu0
        %v2147 = vadd.f32 %v1795, %v2146
        %v2148 = vpop.f32.mrb[0].mxu0
        %v2149 = vadd.f32 %v1799, %v2148
        %v2150 = vpop.f32.mrb[0].mxu0
        %v2151 = vadd.f32 %v1795, %v2150
        %v2152 = vpop.f32.mrb[0].mxu0
        %v2153 = vadd.f32 %v1799, %v2152
        %2154 = vmatprep.mubr.bf16.mxu0 %v1727
        %2155 = vmatmul.mubr.bf16.gmra.mrb[0].mxu0 %v1726
        %v2156 = vpop.f32.mrb[0].mxu0
        %v2157 = vadd.f32 %v1795, %v2156
        %v2158 = vpop.f32.mrb[0].mxu0
        %v2159 = vadd.f32 %v1799, %v2158
        %v2160 = vpop.f32.mrb[0].mxu0
        %v2161 = vadd.f32 %v1795, %v2160
        %v2162 = vpop.f32.mrb[0].mxu0
        %v2163 = vadd.f32 %v1799, %v2162
        %2164 = vmatprep.mubr.bf16.mxu0 %v1729
        %2165 = vmatmul.mubr.bf16.gmra.mrb[0].mxu0 %v1728
        %v2166 = vpop.f32.mrb[0].mxu0
        %v2167 = vadd.f32 %v1795, %v2166
        %v2168 = vpop.f32.mrb[0].mxu0
        %v2169 = vadd.f32 %v1799, %v2168
        %v2170 = vpop.f32.mrb[0].mxu0
        %v2171 = vadd.f32 %v1795, %v2170
        %v2172 = vpop.f32.mrb[0].mxu0
        %v2173 = vadd.f32 %v1799, %v2172
        %2174 = vmatprep.mubr.bf16.mxu0 %v1731
        %2175 = vmatmul.mubr.bf16.gmra.mrb[0].mxu0 %v1730
        %v2176 = vpop.f32.mrb[0].mxu0
        %v2177 = vadd.f32 %v1795, %v2176
        %v2178 = vpop.f32.mrb[0].mxu0
        %v2179 = vadd.f32 %v1799, %v2178
        %v2180 = vpop.f32.mrb[0].mxu0
        %v2181 = vadd.f32 %v1795, %v2180
        %v2182 = vpop.f32.mrb[0].mxu0
        %v2183 = vadd.f32 %v1799, %v2182
        %2184 = vmatprep.mubr.bf16.mxu0 %v1733
        %2185 = vmatmul.mubr.bf16.gmra.mrb[0].mxu0 %v1732
        %v2186 = vpop.f32.mrb[0].mxu0
        %v2187 = vadd.f32 %v1795, %v2186
        %v2188 = vpop.f32.mrb[0].mxu0
        %v2189 = vadd.f32 %v1799, %v2188
        %v2190 = vpop.f32.mrb[0].mxu0
        %v2191 = vadd.f32 %v1795, %v2190
        %v2192 = vpop.f32.mrb[0].mxu0
        %v2193 = vadd.f32 %v1799, %v2192
        %2194 = vmatprep.mubr.bf16.mxu0 %v1735
        %2195 = vmatmul.mubr.bf16.gmra.mrb[0].mxu0 %v1734
        %v2196 = vpop.f32.mrb[0].mxu0
        %v2197 = vadd.f32 %v1795, %v2196
        %v2198 = vpop.f32.mrb[0].mxu0
        %v2199 = vadd.f32 %v1799, %v2198
        %v2200 = vpop.f32.mrb[0].mxu0
        %v2201 = vadd.f32 %v1795, %v2200
        %v2202 = vpop.f32.mrb[0].mxu0
        %v2203 = vadd.f32 %v1799, %v2202
        %2204 = vmatprep.mubr.bf16.mxu0 %v1737
        %2205 = vmatmul.mubr.bf16.gmra.mrb[0].mxu0 %v1736
        %v2206 = vpop.f32.mrb[0].mxu0
        %v2207 = vadd.f32 %v1795, %v2206
        %v2208 = vpop.f32.mrb[0].mxu0
        %v2209 = vadd.f32 %v1799, %v2208
        %v2210 = vpop.f32.mrb[0].mxu0
        %v2211 = vadd.f32 %v1795, %v2210
        %v2212 = vpop.f32.mrb[0].mxu0
        %v2213 = vadd.f32 %v1799, %v2212
        %2214 = vmatprep.mubr.bf16.mxu0 %v1739
        %2215 = vmatmul.mubr.bf16.gmra.mrb[0].mxu0 %v1738
        %v2216 = vpop.f32.mrb[0].mxu0
        %v2217 = vadd.f32 %v1795, %v2216
        %v2218 = vpop.f32.mrb[0].mxu0
        %v2219 = vadd.f32 %v1799, %v2218
        %v2220 = vpop.f32.mrb[0].mxu0
        %v2221 = vadd.f32 %v1795, %v2220
        %v2222 = vpop.f32.mrb[0].mxu0
        %v2223 = vadd.f32 %v1799, %v2222
        %2224 = vmatprep.mubr.bf16.mxu0 %v1741
        %2225 = vmatmul.mubr.bf16.gmra.mrb[0].mxu0 %v1740
        %v2226 = vpop.f32.mrb[0].mxu0
        %v2227 = vadd.f32 %v1795, %v2226
        %v2228 = vpop.f32.mrb[0].mxu0
        %v2229 = vadd.f32 %v1799, %v2228
        %v2230 = vpop.f32.mrb[0].mxu0
        %v2231 = vadd.f32 %v1795, %v2230
        %v2232 = vpop.f32.mrb[0].mxu0
        %v2233 = vadd.f32 %v1799, %v2232
        %2234 = vmatprep.mubr.bf16.mxu0 %v1743
        %2235 = vmatmul.mubr.bf16.gmra.mrb[0].mxu0 %v1742
        %v2236 = vpop.f32.mrb[0].mxu0
        %v2237 = vadd.f32 %v1795, %v2236
        %v2238 = vpop.f32.mrb[0].mxu0
        %v2239 = vadd.f32 %v1799, %v2238
        %v2240 = vpop.f32.mrb[0].mxu0
        %v2241 = vadd.f32 %v1795, %v2240
        %v2242 = vpop.f32.mrb[0].mxu0
        %v2243 = vadd.f32 %v1799, %v2242
        %2244 = vmatprep.mubr.bf16.mxu0 %v1745
        %2245 = vmatmul.mubr.bf16.gmra.mrb[0].mxu0 %v1744
        %v2246 = vpop.f32.mrb[0].mxu0
        %v2247 = vadd.f32 %v1795, %v2246
        %v2248 = vpop.f32.mrb[0].mxu0
        %v2249 = vadd.f32 %v1799, %v2248
        %v2250 = vpop.f32.mrb[0].mxu0
        %v2251 = vadd.f32 %v1795, %v2250
        %v2252 = vpop.f32.mrb[0].mxu0
        %v2253 = vadd.f32 %v1799, %v2252
        %2254 = vmatprep.mubr.bf16.mxu0 %v1747
        %2255 = vmatmul.mubr.bf16.gmra.mrb[0].mxu0 %v1746
        %v2256 = vpop.f32.mrb[0].mxu0
        %v2257 = vadd.f32 %v1795, %v2256
        %v2258 = vpop.f32.mrb[0].mxu0
        %v2259 = vadd.f32 %v1799, %v2258
        %v2260 = vpop.f32.mrb[0].mxu0
        %v2261 = vadd.f32 %v1795, %v2260
        %v2262 = vpop.f32.mrb[0].mxu0
        %v2263 = vadd.f32 %v1799, %v2262
        %2264 = vmatprep.mubr.bf16.mxu0 %v1749
        %2265 = vmatmul.mubr.bf16.gmra.mrb[0].mxu0 %v1748
        %v2266 = vpop.f32.mrb[0].mxu0
        %v2267 = vadd.f32 %v1795, %v2266
        %v2268 = vpop.f32.mrb[0].mxu0
        %v2269 = vadd.f32 %v1799, %v2268
        %v2270 = vpop.f32.mrb[0].mxu0
        %v2271 = vadd.f32 %v1795, %v2270
        %v2272 = vpop.f32.mrb[0].mxu0
        %v2273 = vadd.f32 %v1799, %v2272
        %2274 = vmatprep.mubr.bf16.mxu0 %v1751
        %2275 = vmatmul.mubr.bf16.gmra.mrb[0].mxu0 %v1750
        %v2276 = vpop.f32.mrb[0].mxu0
        %v2277 = vadd.f32 %v1795, %v2276
        %v2278 = vpop.f32.mrb[0].mxu0
        %v2279 = vadd.f32 %v1799, %v2278
        %v2280 = vpop.f32.mrb[0].mxu0
        %v2281 = vadd.f32 %v1795, %v2280
        %v2282 = vpop.f32.mrb[0].mxu0
        %v2283 = vadd.f32 %v1799, %v2282
        %2284 = vmatprep.mubr.bf16.mxu0 %v1753
        %2285 = vmatmul.mubr.bf16.gmra.mrb[0].mxu0 %v1752
        %v2286 = vpop.f32.mrb[0].mxu0
        %v2287 = vadd.f32 %v1795, %v2286
        %v2288 = vpop.f32.mrb[0].mxu0
        %v2289 = vadd.f32 %v1799, %v2288
        %v2290 = vpop.f32.mrb[0].mxu0
        %v2291 = vadd.f32 %v1795, %v2290
        %v2292 = vpop.f32.mrb[0].mxu0
        %v2293 = vadd.f32 %v1799, %v2292
        %2294 = vmatprep.mubr.bf16.mxu0 %v1755
        %2295 = vmatmul.mubr.bf16.gmra.mrb[0].mxu0 %v1754
        %v2296 = vpop.f32.mrb[0].mxu0
        %v2297 = vadd.f32 %v1795, %v2296
        %v2298 = vpop.f32.mrb[0].mxu0
        %v2299 = vadd.f32 %v1799, %v2298
        %v2300 = vpop.f32.mrb[0].mxu0
        %v2301 = vadd.f32 %v1795, %v2300
        %v2302 = vpop.f32.mrb[0].mxu0
        %v2303 = vadd.f32 %v1799, %v2302
        %2304 = vmatprep.mubr.bf16.mxu0 %v1757
        %2305 = vmatmul.mubr.bf16.gmra.mrb[0].mxu0 %v1756
        %v2306 = vpop.f32.mrb[0].mxu0
        %v2307 = vadd.f32 %v1795, %v2306
        %v2308 = vpop.f32.mrb[0].mxu0
        %v2309 = vadd.f32 %v1799, %v2308
        %v2310 = vpop.f32.mrb[0].mxu0
        %v2311 = vadd.f32 %v1795, %v2310
        %v2312 = vpop.f32.mrb[0].mxu0
        %v2313 = vadd.f32 %v1799, %v2312
        %2314 = vdwg.mxu0
        %2315 = vst [vmem:[%s258] sm:$0xff] %v1997
        %2316 = vst [vmem:[%s258 + $0x8] sm:$0xff] %v1999
        %2317 = vst [vmem:[%s258 + $0x10] sm:$0xff] %v2001
        %2318 = vst [vmem:[%s258 + $0x18] sm:$0xff] %v2003
        %2319 = vst [vmem:[%s258 + $0x20] sm:$0xff] %v2007
        %2320 = vst [vmem:[%s258 + $0x28] sm:$0xff] %v2009
        %2321 = vst [vmem:[%s258 + $0x30] sm:$0xff] %v2011
        %2322 = vst [vmem:[%s258 + $0x38] sm:$0xff] %v2013
        %2323 = vst [vmem:[%s258 + $0x40] sm:$0xff] %v2017
        %2324 = vst [vmem:[%s258 + $0x48] sm:$0xff] %v2019
        %2325 = vst [vmem:[%s258 + $0x50] sm:$0xff] %v2021
        %2326 = vst [vmem:[%s258 + $0x58] sm:$0xff] %v2023
        %2327 = vst [vmem:[%s258 + $0x60] sm:$0xff] %v2027
        %2328 = vst [vmem:[%s258 + $0x68] sm:$0xff] %v2029
        %2329 = vst [vmem:[%s258 + $0x70] sm:$0xff] %v2031
        %2330 = vst [vmem:[%s258 + $0x78] sm:$0xff] %v2033
        %2331 = vst [vmem:[%s258 + $0x80] sm:$0xff] %v2037
        %2332 = vst [vmem:[%s258 + $0x88] sm:$0xff] %v2039
        %2333 = vst [vmem:[%s258 + $0x90] sm:$0xff] %v2041
        %2334 = vst [vmem:[%s258 + $0x98] sm:$0xff] %v2043
        %2335 = vst [vmem:[%s258 + $0xa0] sm:$0xff] %v2047
        %2336 = vst [vmem:[%s258 + $0xa8] sm:$0xff] %v2049
        %2337 = vst [vmem:[%s258 + $0xb0] sm:$0xff] %v2051
        %2338 = vst [vmem:[%s258 + $0xb8] sm:$0xff] %v2053
        %2339 = vst [vmem:[%s258 + $0xc0] sm:$0xff] %v2057
        %2340 = vst [vmem:[%s258 + $0xc8] sm:$0xff] %v2059
        %2341 = vst [vmem:[%s258 + $0xd0] sm:$0xff] %v2061
        %2342 = vst [vmem:[%s258 + $0xd8] sm:$0xff] %v2063
        %2343 = vst [vmem:[%s258 + $0xe0] sm:$0xff] %v2067
        %2344 = vst [vmem:[%s258 + $0xe8] sm:$0xff] %v2069
        %2345 = vst [vmem:[%s258 + $0xf0] sm:$0xff] %v2071
        %2346 = vst [vmem:[%s258 + $0xf8] sm:$0xff] %v2073
        %2347 = vst [vmem:[%s258 + $0x100] sm:$0xff] %v2077
        %2348 = vst [vmem:[%s258 + $0x108] sm:$0xff] %v2079
        %2349 = vst [vmem:[%s258 + $0x110] sm:$0xff] %v2081
        %2350 = vst [vmem:[%s258 + $0x118] sm:$0xff] %v2083
        %2351 = vst [vmem:[%s258 + $0x120] sm:$0xff] %v2087
        %2352 = vst [vmem:[%s258 + $0x128] sm:$0xff] %v2089
        %2353 = vst [vmem:[%s258 + $0x130] sm:$0xff] %v2091
        %2354 = vst [vmem:[%s258 + $0x138] sm:$0xff] %v2093
        %2355 = vst [vmem:[%s258 + $0x140] sm:$0xff] %v2097
        %2356 = vst [vmem:[%s258 + $0x148] sm:$0xff] %v2099
        %2357 = vst [vmem:[%s258 + $0x150] sm:$0xff] %v2101
        %2358 = vst [vmem:[%s258 + $0x158] sm:$0xff] %v2103
        %2359 = vst [vmem:[%s258 + $0x160] sm:$0xff] %v2107
        %2360 = vst [vmem:[%s258 + $0x168] sm:$0xff] %v2109
        %2361 = vst [vmem:[%s258 + $0x170] sm:$0xff] %v2111
        %2362 = vst [vmem:[%s258 + $0x178] sm:$0xff] %v2113
        %2363 = vst [vmem:[%s258 + $0x180] sm:$0xff] %v2117
        %2364 = vst [vmem:[%s258 + $0x188] sm:$0xff] %v2119
        %2365 = vst [vmem:[%s258 + $0x190] sm:$0xff] %v2121
        %2366 = vst [vmem:[%s258 + $0x198] sm:$0xff] %v2123
        %2367 = vst [vmem:[%s258 + $0x1a0] sm:$0xff] %v2127
        %2368 = vst [vmem:[%s258 + $0x1a8] sm:$0xff] %v2129
        %2369 = vst [vmem:[%s258 + $0x1b0] sm:$0xff] %v2131
        %2370 = vst [vmem:[%s258 + $0x1b8] sm:$0xff] %v2133
        %2371 = vst [vmem:[%s258 + $0x1c0] sm:$0xff] %v2137
        %2372 = vst [vmem:[%s258 + $0x1c8] sm:$0xff] %v2139
        %2373 = vst [vmem:[%s258 + $0x1d0] sm:$0xff] %v2141
        %2374 = vst [vmem:[%s258 + $0x1d8] sm:$0xff] %v2143
        %2375 = vst [vmem:[%s258 + $0x1e0] sm:$0xff] %v2147
        %2376 = vst [vmem:[%s258 + $0x1e8] sm:$0xff] %v2149
        %2377 = vst [vmem:[%s258 + $0x1f0] sm:$0xff] %v2151
        %2378 = vst [vmem:[%s258 + $0x1f8] sm:$0xff] %v2153
        %2379 = vst [vmem:[%s258 + $0x200] sm:$0xff] %v2157
        %2380 = vst [vmem:[%s258 + $0x208] sm:$0xff] %v2159
        %2381 = vst [vmem:[%s258 + $0x210] sm:$0xff] %v2161
        %2382 = vst [vmem:[%s258 + $0x218] sm:$0xff] %v2163
        %2383 = vst [vmem:[%s258 + $0x220] sm:$0xff] %v2167
        %2384 = vst [vmem:[%s258 + $0x228] sm:$0xff] %v2169
        %2385 = vst [vmem:[%s258 + $0x230] sm:$0xff] %v2171
        %2386 = vst [vmem:[%s258 + $0x238] sm:$0xff] %v2173
        %2387 = vst [vmem:[%s258 + $0x240] sm:$0xff] %v2177
        %2388 = vst [vmem:[%s258 + $0x248] sm:$0xff] %v2179
        %2389 = vst [vmem:[%s258 + $0x250] sm:$0xff] %v2181
        %2390 = vst [vmem:[%s258 + $0x258] sm:$0xff] %v2183
        %2391 = vst [vmem:[%s258 + $0x260] sm:$0xff] %v2187
        %2392 = vst [vmem:[%s258 + $0x268] sm:$0xff] %v2189
        %2393 = vst [vmem:[%s258 + $0x270] sm:$0xff] %v2191
        %2394 = vst [vmem:[%s258 + $0x278] sm:$0xff] %v2193
        %2395 = vst [vmem:[%s258 + $0x280] sm:$0xff] %v2197
        %2396 = vst [vmem:[%s258 + $0x288] sm:$0xff] %v2199
        %2397 = vst [vmem:[%s258 + $0x290] sm:$0xff] %v2201
        %2398 = vst [vmem:[%s258 + $0x298] sm:$0xff] %v2203
        %2399 = vst [vmem:[%s258 + $0x2a0] sm:$0xff] %v2207
        %2400 = vst [vmem:[%s258 + $0x2a8] sm:$0xff] %v2209
        %2401 = vst [vmem:[%s258 + $0x2b0] sm:$0xff] %v2211
        %2402 = vst [vmem:[%s258 + $0x2b8] sm:$0xff] %v2213
        %2403 = vst [vmem:[%s258 + $0x2c0] sm:$0xff] %v2217
        %2404 = vst [vmem:[%s258 + $0x2c8] sm:$0xff] %v2219
        %2405 = vst [vmem:[%s258 + $0x2d0] sm:$0xff] %v2221
        %2406 = vst [vmem:[%s258 + $0x2d8] sm:$0xff] %v2223
        %2407 = vst [vmem:[%s258 + $0x2e0] sm:$0xff] %v2227
        %2408 = vst [vmem:[%s258 + $0x2e8] sm:$0xff] %v2229
        %2409 = vst [vmem:[%s258 + $0x2f0] sm:$0xff] %v2231
        %2410 = vst [vmem:[%s258 + $0x2f8] sm:$0xff] %v2233
        %2411 = vst [vmem:[%s258 + $0x300] sm:$0xff] %v2237
        %2412 = vst [vmem:[%s258 + $0x308] sm:$0xff] %v2239
        %2413 = vst [vmem:[%s258 + $0x310] sm:$0xff] %v2241
        %2414 = vst [vmem:[%s258 + $0x318] sm:$0xff] %v2243
        %2415 = vst [vmem:[%s258 + $0x320] sm:$0xff] %v2247
        %2416 = vst [vmem:[%s258 + $0x328] sm:$0xff] %v2249
        %2417 = vst [vmem:[%s258 + $0x330] sm:$0xff] %v2251
        %2418 = vst [vmem:[%s258 + $0x338] sm:$0xff] %v2253
        %2419 = vst [vmem:[%s258 + $0x340] sm:$0xff] %v2257
        %2420 = vst [vmem:[%s258 + $0x348] sm:$0xff] %v2259
        %2421 = vst [vmem:[%s258 + $0x350] sm:$0xff] %v2261
        %2422 = vst [vmem:[%s258 + $0x358] sm:$0xff] %v2263
        %2423 = vst [vmem:[%s258 + $0x360] sm:$0xff] %v2267
        %2424 = vst [vmem:[%s258 + $0x368] sm:$0xff] %v2269
        %2425 = vst [vmem:[%s258 + $0x370] sm:$0xff] %v2271
        %2426 = vst [vmem:[%s258 + $0x378] sm:$0xff] %v2273
        %2427 = vst [vmem:[%s258 + $0x380] sm:$0xff] %v2277
        %2428 = vst [vmem:[%s258 + $0x388] sm:$0xff] %v2279
        %2429 = vst [vmem:[%s258 + $0x390] sm:$0xff] %v2281
        %2430 = vst [vmem:[%s258 + $0x398] sm:$0xff] %v2283
        %2431 = vst [vmem:[%s258 + $0x3a0] sm:$0xff] %v2287
        %2432 = vst [vmem:[%s258 + $0x3a8] sm:$0xff] %v2289
        %2433 = vst [vmem:[%s258 + $0x3b0] sm:$0xff] %v2291
        %2434 = vst [vmem:[%s258 + $0x3b8] sm:$0xff] %v2293
        %2435 = vst [vmem:[%s258 + $0x3c0] sm:$0xff] %v2297
        %2436 = vst [vmem:[%s258 + $0x3c8] sm:$0xff] %v2299
        %2437 = vst [vmem:[%s258 + $0x3d0] sm:$0xff] %v2301
        %2438 = vst [vmem:[%s258 + $0x3d8] sm:$0xff] %v2303
        %2439 = vst [vmem:[%s258 + $0x3e0] sm:$0xff] %v2307
        %2440 = vst [vmem:[%s258 + $0x3e8] sm:$0xff] %v2309
        %2441 = vst [vmem:[%s258 + $0x3f0] sm:$0xff] %v2311
        %2442 = vst [vmem:[%s258 + $0x3f8] sm:$0xff] %v2313
        %s2443 = sand.u32 %s141, 1
        %s2444 = scalar_lea.sflag [#allocation4], %s2443
        %s2445 = sand.u32 %s141, 1
        %s2446 = smul.addr %s2445, 1024
        %s2447 = scalar_lea.vmem [#allocation7], %s2446
        // Predicated region
        $region49: #{tpu_custom_call.1} parent=39 // pred_check
          %p2448 = pneg %p151
        $region50: #{tpu_custom_call.1} parent=39 // pred_check_branch
          %2450 = sbr.rel (%p2448) target = $region52
        $region51: #{tpu_custom_call.1} parent=39 // pred_region
          %s2451 = smul.u32 64, %s23
          %s2453 = ssub.s32 16384, 16384
          %2454 = vsyncadd %s2444, %s2453
          %s2455 = smul.addr %s2451, 2
          %s2456 = smul.addr %s2455, 128
          %s2457 = scalar_lea.hbm %s5, %s2456
          %s2458 = sshll.u32 %s2447, 4
          %s2459 = int_to_ptr.vmem [resolvable:$true] %s2458
          %2464 = dma.vmem_to_hbm [thread:$0]  %s2459, 16384, %s2457, %s2444, 256, 256, 16
        $region52: #{tpu_custom_call.1} parent=39 // pred_fallthru
          _
      $region40: #{tpu_custom_call.1} parent=5 // pred_fallthru
        _
      %p2465 = scmp.le.s32.totalorder 2, %s18
      // Predicated region
      $region53: #{tpu_custom_call.1} parent=5 // pred_check
        %p2466 = pneg %p2465
      $region54: #{tpu_custom_call.1} parent=5 // pred_check_branch
        %2468 = sbr.rel (%p2466) target = $region56
      $region55: #{tpu_custom_call.1} parent=5 // pred_region
        %s2469 = ssub.s32 %s18, 2
        // Predicated region
        $region57: #{tpu_custom_call.1} parent=55 // pred_check
          %p2470 = pneg %p157
        $region58: #{tpu_custom_call.1} parent=55 // pred_check_branch
          %2472 = sbr.rel (%p2470) target = $region60
        $region59: #{tpu_custom_call.1} parent=55 // pred_region
          %s2473 = sand.u32 %s142, 1
          %s2474 = scalar_lea.sflag [#allocation4], %s2473
          %s2475 = sand.u32 %s142, 1
          %s2476 = smul.addr %s2475, 1024
          %s2477 = scalar_lea.vmem [#allocation7], %s2476
          %2478 = dma.done %s2474, 16384
        $region60: #{tpu_custom_call.1} parent=55 // pred_fallthru
          _
      $region56: #{tpu_custom_call.1} parent=5 // pred_fallthru
        _
    $region6: #{tpu_custom_call.1} parent=1 // loop_footer
      %s22 = sadd.s32 1, %s18
    $region7: #{tpu_custom_call.1} parent=1 // loop_footer_branch
      %17 = sbr.rel target = $region3
    $region8: #{tpu_custom_call.1} parent=1 // loop_exit
      _
    %2479 = vsyncpa [#allocation3], 1
    %s2480 = scalar_lea.sflag [#allocation3], 1
    %2481 = vsyncpa %s2480, 1
    %2482 = vsyncpa [#allocation6], 1
    %2483 = vsyncpa [#allocation4], 1
    %s2484 = scalar_lea.sflag [#allocation4], 1
    %2485 = vsyncpa %s2484, 1

</llo_original>
